<compile_context>
chip_gen: v5e
topology: v5e:2x2
jax: 0.10.0
libtpu: 0.0.40
codegen_flags: <defaults>
</compile_context>

<pallas_src>
import math
from functools import partial

import jax
import jax.numpy as jnp
from jax.experimental import pallas as pl
from jax.experimental.pallas import tpu as pltpu

LANE = 128
SUBLANE = 8

# row layout of the packed per-layer vector slab
_LN_G, _LN_B, _B_ATTN, _B2, _FIN_G, _FIN_B, _VEC_ROWS = 0, 6, 12, 20, 21, 22, 24


def _round_up(x, m):
    return (x + m - 1) // m * m


# --------------------------------------------------------------------------------------
# Kernel: grid = (batch_group, layer).  One step = one full decoder layer on one
# lane-padded token slab.  Activations carried in VMEM scratch across the layer axis.
# --------------------------------------------------------------------------------------
def decoder_stack_kernel(
    q_ref,       # (nb, dp)         lane-padded input tokens of this batch group
    kv_ref,      # (nkv, dp)        lane-padded kv tokens of this batch group
    vec_ref,     # (24, dp)         [ln_g(6), ln_b(6), b_attn(8), b2, fin_g, fin_b, pad]
    w_attn_ref,  # (8*dr, dp)       row-packed [sa_q, sa_k, sa_v, sa_out, ca_q, ca_k, ca_v, ca_out]
    w1_ref,      # (dr, hp)
    b1_ref,      # (1, hp)
    w2_ref,      # (hr, dp)
    out_ref,     # (nb, dp)
    x_scr,       # VMEM (nb, dp) f32  -- activations carried across the layer axis
    *,
    d_real,      # true model dim
    dr,          # model dim rounded up to sublane multiple (packed weight row count)
    hr,          # MLP hidden dim rounded up to sublane multiple
    sq,          # true query seq len
    sq_pad,      # padded query seq len (multiple of 8)
    skv,         # true kv seq len
    skv_pad,     # padded kv seq len (multiple of 8)
    bg,          # batch elements per grid group
):
    layer = pl.program_id(1)
    n_layers = pl.num_programs(1)
    f32 = jnp.float32
    dp = q_ref.shape[-1]

    # Lane mask over the padded model dim (padded lanes of activations are always zero,
    # so the mean needs no mask; the variance does).
    lane_mask = (jax.lax.broadcasted_iota(jnp.int32, (1, dp), 1) < d_real).astype(f32)
    inv_d = 1.0 / d_real

    def vrow(i):
        return vec_ref[i:i + 1, :]

    def layer_norm(x, g, b, eps=1e-5):
        mu = jnp.sum(x, axis=-1, keepdims=True) * inv_d
        diff = (x - mu) * lane_mask
        var = jnp.sum(diff * diff, axis=-1, keepdims=True) * inv_d
        return diff * jax.lax.rsqrt(var + eps) * g + b

    def ln(x, i):                      # i = layer-norm index 0..5
        return layer_norm(x, vrow(_LN_G + i), vrow(_LN_B + i))

    def proj(h, i):
        # packed weight i lives in rows [i*dr, (i+1)*dr); h's lanes >= d_real are zero,
        # so contracting only the first dr lanes is exact (and shortens the MXU push).
        w = w_attn_ref[i * dr:(i + 1) * dr, :]
        return jnp.dot(h[:, :dr], w, preferred_element_type=f32) + vrow(_B_ATTN + i)

    def softmax(s):
        m = jnp.max(s, axis=-1, keepdims=True)
        e = jnp.exp(s - m)
        # exact reciprocal to stay within tight tolerance vs the f32 reference
        return e * pl.reciprocal(jnp.sum(e, axis=-1, keepdims=True), approx=False)

    def attend(qp, kp, vp, kv_rows, key_bias):
        # qp: (bg*sq_pad, dp); kp/vp: (bg*kv_rows, dp).  Tiny unrolled loop over the
        # batch elements of this group (attention must not mix batch elements).
        outs = []
        for bi in range(bg):
            qr = qp[bi * sq_pad:(bi + 1) * sq_pad, :dr]
            kr = kp[bi * kv_rows:(bi + 1) * kv_rows, :dr]
            vr = vp[bi * kv_rows:(bi + 1) * kv_rows, :]
            s = jax.lax.dot_general(
                qr, kr, (((1,), (1,)), ((), ())), preferred_element_type=f32)
            if key_bias is not None:
                s = s + key_bias
            p = softmax(s)
            outs.append(jnp.dot(p, vr, preferred_element_type=f32))
        return outs[0] if bg == 1 else jnp.concatenate(outs, axis=0)

    # key-position masks for padded sequence positions (static -> only built if needed)
    sa_bias = None
    if sq_pad != sq:
        sa_bias = jnp.where(
            jax.lax.broadcasted_iota(jnp.int32, (1, sq_pad), 1) < sq, 0.0, -1e30
        ).astype(f32)
    ca_bias = None
    if skv_pad != skv:
        ca_bias = jnp.where(
            jax.lax.broadcasted_iota(jnp.int32, (1, skv_pad), 1) < skv, 0.0, -1e30
        ).astype(f32)

    # ---- load carried activations (layer 0 reads the padded input slab) ----
    @pl.when(layer == 0)
    def _():
        x_scr[...] = q_ref[...].astype(f32)

    x = x_scr[...]
    kv = kv_ref[...].astype(f32)

    # ---------------- self attention block (pre-LN, residual) ----------------
    # NOTE: do_casual=True in the module only selects the fused projection; with
    # attn_mask=None no causal mask is applied -> plain (non-causal) self attention.
    h = ln(x, 0)
    q_sa = proj(h, 0)                     # 1/sqrt(head_dim) already folded in
    k_sa = proj(h, 1)
    v_sa = proj(h, 2)
    a = attend(q_sa, k_sa, v_sa, sq_pad, sa_bias)      # num_heads=1 -> single head
    a = ln(a, 1)                                        # MHA-internal layer norm
    a = proj(a, 3)                                      # out projection
    x = x + a

    # ---------------- cross attention block (pre-LN, residual) ----------------
    hq = ln(x, 2)
    hk = ln(kv, 3)
    q_ca = proj(hq, 4)                    # scale folded in
    k_ca = proj(hk, 5)
    v_ca = proj(hk, 6)
    a = attend(q_ca, k_ca, v_ca, skv_pad, ca_bias)
    a = ln(a, 4)
    a = proj(a, 7)
    x = x + a

    # ---------------- dense block (pre-LN, residual) ----------------
    h = ln(x, 5)
    h = jnp.dot(h[:, :dr], w1_ref[...], preferred_element_type=f32) + b1_ref[...]
    h = jnp.where(h > 0, h, 0.1 * h)      # LeakyReLU(0.1)
    h = jnp.dot(h[:, :hr], w2_ref[...], preferred_element_type=f32) + vrow(_B2)
    x = x + h

    x_scr[...] = x

    # ---------------- final norm + lane-dense store at the last layer ----------------
    @pl.when(layer == n_layers - 1)
    def _():
        y = layer_norm(x, vrow(_FIN_G), vrow(_FIN_B))
        out_ref[...] = y.astype(out_ref.dtype)


# --------------------------------------------------------------------------------------
# Wrapper: pads/packs parameters once, launches one pallas_call for the whole stack.
# --------------------------------------------------------------------------------------
def transformer_decoder(q_seq, kv_seq, layers, final_g, final_b,
                        *, num_heads=1, batch_groups=None):
    B, Sq, D = q_seq.shape
    Bk, Skv, Dk = kv_seq.shape
    assert (Bk, Dk) == (B, D)
    assert num_heads == 1, "kernel is specialised to the module default num_heads=1"
    head_dim = D // num_heads
    L = len(layers)
    Hff = layers[0]["w1"].shape[1]

    dp = _round_up(D, LANE)           # lane-padded model dim (activation / weight cols)
    hp = _round_up(Hff, LANE)         # lane-padded MLP hidden dim
    dr = _round_up(D, SUBLANE)        # sublane-padded model dim (packed weight rows)
    hr = _round_up(Hff, SUBLANE)
    sq_pad = _round_up(Sq, SUBLANE)
    skv_pad = _round_up(Skv, SUBLANE)

    if batch_groups is None:
        # Only split across TensorCores when there is enough work per group; at small
        # sizes the kernel is DMA/overhead bound and splitting just re-fetches weights.
        batch_groups = 2 if (B % 2 == 0 and B * sq_pad >= 512) else 1
    G = batch_groups
    assert B % G == 0
    bg = B // G
    nb = bg * sq_pad
    nkv = bg * skv_pad

    scale = 1.0 / math.sqrt(head_dim)

    def pad2(a, r, c):
        return jnp.pad(a, ((0, r - a.shape[0]), (0, c - a.shape[1])))

    def pad1(a, c):
        return jnp.pad(a, ((0, c - a.shape[0]),))

    # ---- pack per-layer parameters (done once; pure XLA, not per-step work) ----
    vec_l, w_attn_l, w1_l, b1_l, w2_l = [], [], [], [], []
    fin_g_row = pad1(final_g, dp)[None, :]
    fin_b_row = pad1(final_b, dp)[None, :]
    for p in layers:
        # split the fused qkv projection into clean (D,D) mats; fold the attention
        # scale into the q projections (weight AND bias).
        wq = p["w_qkv"][:, 0:D] * scale
        wk = p["w_qkv"][:, D:2 * D]
        wv = p["w_qkv"][:, 2 * D:3 * D]
        bq = p["b_qkv"][0:D] * scale
        bk = p["b_qkv"][D:2 * D]
        bv = p["b_qkv"][2 * D:3 * D]
        mats = [wq, wk, wv, p["w_dd"][0],
                p["w_dd"][1] * scale, p["w_dd"][2], p["w_dd"][3], p["w_dd"][4]]
        biases = [bq, bk, bv, p["b_dd"][0],
                  p["b_dd"][1] * scale, p["b_dd"][2], p["b_dd"][3], p["b_dd"][4]]

        # row-packed attention weights: real input rows only (sublane aligned)
        w_attn_l.append(jnp.concatenate([pad2(m, dr, dp) for m in mats], axis=0))

        # packed vector slab: [ln_g(6), ln_b(6), b_attn(8), b2, fin_g, fin_b, zero]
        vec = jnp.concatenate([
            jnp.pad(p["ln_g"], ((0, 0), (0, dp - D))),
            jnp.pad(p["ln_b"], ((0, 0), (0, dp - D))),
            jnp.stack([pad1(b, dp) for b in biases]),
            pad1(p["b2"], dp)[None, :],
            fin_g_row,
            fin_b_row,
            jnp.zeros((1, dp), jnp.float32),
        ], axis=0)
        assert vec.shape[0] == _VEC_ROWS
        vec_l.append(vec)

        w1_l.append(pad2(p["w1"], dr, hp))
        b1_l.append(pad1(p["b1"], hp)[None, :])
        w2_l.append(pad2(p["w2"], hr, dp))

    vecs = jnp.stack(vec_l)          # (L, 24, dp)
    w_attn = jnp.stack(w_attn_l)     # (L, 8*dr, dp)
    w1 = jnp.stack(w1_l)             # (L, dr, hp)
    b1 = jnp.stack(b1_l)             # (L, 1, hp)
    w2 = jnp.stack(w2_l)             # (L, hr, dp)

    # ---- pad activations to lane/sublane-dense slabs ----
    q_pad = jnp.pad(q_seq, ((0, 0), (0, sq_pad - Sq), (0, dp - D))
                    ).reshape(B * sq_pad, dp)
    kv_pad = jnp.pad(kv_seq, ((0, 0), (0, skv_pad - Skv), (0, dp - D))
                     ).reshape(B * skv_pad, dp)

    kernel = partial(
        decoder_stack_kernel,
        d_real=D, dr=dr, hr=hr, sq=Sq, sq_pad=sq_pad, skv=Skv, skv_pad=skv_pad, bg=bg,
    )

    grid_spec = pltpu.PrefetchScalarGridSpec(
        num_scalar_prefetch=0,
        grid=(G, L),                    # (parallel batch groups, sequential layers)
        in_specs=[
            pl.BlockSpec((nb, dp), lambda g, l: (g, 0)),                # q tokens
            pl.BlockSpec((nkv, dp), lambda g, l: (g, 0)),               # kv tokens
            pl.BlockSpec((None, _VEC_ROWS, dp), lambda g, l: (l, 0, 0)),  # vector slab
            pl.BlockSpec((None, 8 * dr, dp), lambda g, l: (l, 0, 0)),   # packed attn W
            pl.BlockSpec((None, dr, hp), lambda g, l: (l, 0, 0)),       # w1
            pl.BlockSpec((None, 1, hp), lambda g, l: (l, 0, 0)),        # b1
            pl.BlockSpec((None, hr, dp), lambda g, l: (l, 0, 0)),       # w2
        ],
        out_specs=pl.BlockSpec((nb, dp), lambda g, l: (g, 0)),
        scratch_shapes=[pltpu.VMEM((nb, dp), jnp.float32)],
    )

    out = pl.pallas_call(
        kernel,
        out_shape=jax.ShapeDtypeStruct((B * sq_pad, dp), q_seq.dtype),
        grid_spec=grid_spec,
        compiler_params=pltpu.CompilerParams(
            dimension_semantics=("parallel", "arbitrary")),
    )(q_pad, kv_pad, vecs, w_attn, w1, b1, w2)

    return out.reshape(B, sq_pad, dp)[:, :Sq, :D]


# --------------------------------------------------------------------------------------
# Pure-JAX reference (mirrors the PyTorch TransformerDecoder forward, masks/ctxt = None)
# --------------------------------------------------------------------------------------
def reference(q_seq, kv_seq, layers, final_g, final_b, *, head_dim):
    def ln(x, g, b, eps=1e-5):
        mu = jnp.mean(x, -1, keepdims=True)
        var = jnp.mean((x - mu) ** 2, -1, keepdims=True)
        return (x - mu) / jnp.sqrt(var + eps) * g + b

    def attend(q, k, v):
        s = jnp.einsum("bqd,bkd->bqk", q, k) / math.sqrt(head_dim)
        a = jax.nn.softmax(s, axis=-1)
        return jnp.einsum("bqk,bkd->bqd", a, v)

    D = q_seq.shape[-1]
    x = q_seq
    for p in layers:
        # self attn
        h = ln(x, p["ln_g"][0], p["ln_b"][0])
        qkv = h @ p["w_qkv"] + p["b_qkv"]
        a = attend(qkv[..., :D], qkv[..., D:2 * D], qkv[..., 2 * D:])
        a = ln(a, p["ln_g"][1], p["ln_b"][1]) @ p["w_dd"][0] + p["b_dd"][0]
        x = x + a
        # cross attn
        hq = ln(x, p["ln_g"][2], p["ln_b"][2])
        hk = ln(kv_seq, p["ln_g"][3], p["ln_b"][3])
        qc = hq @ p["w_dd"][1] + p["b_dd"][1]
        kc = hk @ p["w_dd"][2] + p["b_dd"][2]
        vc = hk @ p["w_dd"][3] + p["b_dd"][3]
        a = attend(qc, kc, vc)
        a = ln(a, p["ln_g"][4], p["ln_b"][4]) @ p["w_dd"][4] + p["b_dd"][4]
        x = x + a
        # dense
        h = ln(x, p["ln_g"][5], p["ln_b"][5])
        h = h @ p["w1"] + p["b1"]
        h = jnp.where(h > 0, h, 0.1 * h)
        x = x + h @ p["w2"] + p["b2"]
    return ln(x, final_g, final_b)


# --------------------------------------------------------------------------------------
# Main
# --------------------------------------------------------------------------------------
if __name__ == "__main__":
    B, Sq, Skv, D, Hff, NUM_LAYERS = 2, 8, 10, 32, 32, 3   # model_dim=32, num_heads=1

    key = jax.random.PRNGKey(0)

    def uni(k, shape, fan_in):
        lim = 1.0 / math.sqrt(fan_in)
        return jax.random.uniform(k, shape, jnp.float32, -lim, lim)

    layers = []
    for i in range(NUM_LAYERS):
        ks = jax.random.split(jax.random.fold_in(key, i), 10)
        layers.append({
            # layer norms [preSA, sa_inner, preC1, preC2, ca_inner, preNN]
            "ln_g": 1.0 + 0.05 * jax.random.normal(ks[0], (6, D), jnp.float32),
            "ln_b": 0.05 * jax.random.normal(ks[1], (6, D), jnp.float32),
            # self-attn fused qkv projection (x @ W convention)
            "w_qkv": uni(ks[2], (D, 3 * D), D),
            "b_qkv": uni(ks[3], (3 * D,), D),
            # stacked (D,D) linears: [sa_out, ca_q, ca_k, ca_v, ca_out]
            "w_dd": uni(ks[4], (5, D, D), D),
            "b_dd": uni(ks[5], (5, D), D),
            # dense network (mattstools default MLP)
            "w1": uni(ks[6], (D, Hff), D),
            "b1": uni(ks[7], (Hff,), D),
            "w2": uni(ks[8], (Hff, D), Hff),
            "b2": uni(ks[9], (D,), Hff),
        })

    kd = jax.random.split(jax.random.fold_in(key, 999), 4)
    final_g = 1.0 + 0.05 * jax.random.normal(kd[0], (D,), jnp.float32)
    final_b = 0.05 * jax.random.normal(kd[1], (D,), jnp.float32)
    q_seq = jax.random.normal(kd[2], (B, Sq, D), jnp.float32)
    kv_seq = jax.random.normal(kd[3], (B, Skv, D), jnp.float32)

    out = transformer_decoder(q_seq, kv_seq, layers, final_g, final_b, num_heads=1)
    out = jax.block_until_ready(out)

    ref = reference(q_seq, kv_seq, layers, final_g, final_b, head_dim=D)
    assert out.shape == (B, Sq, D)
    max_err = float(jnp.max(jnp.abs(out - ref)))
    assert jnp.allclose(out, ref, atol=1e-3, rtol=1e-3), f"mismatch vs reference (max abs err {max_err})"

    print("KERNEL_OK")
</pallas_src>

<mosaic_0001>
module attributes {stable_mosaic.version = 11 : i64} {
  func.func @decoder_stack_kernel(%arg0: i32, %arg1: i32, %arg2: memref<16x128xf32, #tpu.memory_space<vmem>>, %arg3: memref<32x128xf32, #tpu.memory_space<vmem>>, %arg4: memref<1x24x128xf32, #tpu.memory_space<vmem>>, %arg5: memref<1x256x128xf32, #tpu.memory_space<vmem>>, %arg6: memref<1x32x128xf32, #tpu.memory_space<vmem>>, %arg7: memref<1x1x128xf32, #tpu.memory_space<vmem>>, %arg8: memref<1x32x128xf32, #tpu.memory_space<vmem>>, %arg9: memref<16x128xf32, #tpu.memory_space<vmem>>, %arg10: memref<16x128xf32, #tpu.memory_space<vmem>>) attributes {dimension_semantics = [#tpu.dimension_semantics<parallel>, #tpu.dimension_semantics<arbitrary>], iteration_bounds = array<i64: 1, 3>, scalar_prefetch = 0 : i64, scratch_operands = 1 : i64, tpu.core_type = #tpu.core_type<tc>, window_params = [{transform_indices = @transform_0, window_bounds = array<i64: 16, 128>}, {transform_indices = @transform_1, window_bounds = array<i64: 32, 128>}, {transform_indices = @transform_2, window_bounds = array<i64: 1, 24, 128>}, {transform_indices = @transform_3, window_bounds = array<i64: 1, 256, 128>}, {transform_indices = @transform_4, window_bounds = array<i64: 1, 32, 128>}, {transform_indices = @transform_5, window_bounds = array<i64: 1, 1, 128>}, {transform_indices = @transform_6, window_bounds = array<i64: 1, 32, 128>}, {transform_indices = @transform_7, window_bounds = array<i64: 16, 128>}]} {
    %0 = tpu.iota {dimensions = array<i32: 1>} : vector<1x128xi32>
    %c32_i32 = arith.constant 32 : i32
    %1 = vector.broadcast %c32_i32 : i32 to vector<1x128xi32>
    %2 = arith.cmpi slt, %0, %1 : vector<1x128xi32>
    %3 = arith.extui %2 : vector<1x128xi1> to vector<1x128xi32>
    %4 = arith.sitofp %3 : vector<1x128xi32> to vector<1x128xf32>
    %5 = tpu.iota {dimensions = array<i32: 1>} : vector<1x16xi32>
    %c10_i32 = arith.constant 10 : i32
    %6 = vector.broadcast %c10_i32 : i32 to vector<1x16xi32>
    %7 = arith.cmpi slt, %5, %6 : vector<1x16xi32>
    %cst = arith.constant 0.000000e+00 : f32
    %cst_0 = arith.constant -1.000000e+30 : f32
    %8 = vector.broadcast %cst : f32 to vector<1x16xf32>
    %9 = vector.broadcast %cst_0 : f32 to vector<1x16xf32>
    %10 = arith.select %7, %8, %9 : vector<1x16xi1>, vector<1x16xf32>
    %c0_i32 = arith.constant 0 : i32
    %11 = arith.cmpi eq, %arg1, %c0_i32 : i32
    %12 = arith.extui %11 : i1 to i32
    %c0_i32_1 = arith.constant 0 : i32
    %13 = arith.cmpi ne, %12, %c0_i32_1 : i32
    scf.if %13 {
      %c0_135 = arith.constant 0 : index
      %c0_136 = arith.constant 0 : index
      %330 = vector.load %arg2[%c0_135, %c0_136] : memref<16x128xf32, #tpu.memory_space<vmem>>, vector<16x128xf32>
      %c0_137 = arith.constant 0 : index
      %c0_138 = arith.constant 0 : index
      %331 = vector.load %arg10[%c0_137, %c0_138] : memref<16x128xf32, #tpu.memory_space<vmem>>, vector<16x128xf32>
      tpu.vector_store %arg10[%c0_137, %c0_138], %330 {strides = array<i32>} : memref<16x128xf32, #tpu.memory_space<vmem>>, vector<16x128xf32>,
    } else {
    }
    %c0 = arith.constant 0 : index
    %c0_2 = arith.constant 0 : index
    %14 = vector.load %arg10[%c0, %c0_2] : memref<16x128xf32, #tpu.memory_space<vmem>>, vector<16x128xf32>
    %c0_3 = arith.constant 0 : index
    %c0_4 = arith.constant 0 : index
    %15 = vector.load %arg3[%c0_3, %c0_4] : memref<32x128xf32, #tpu.memory_space<vmem>>, vector<32x128xf32>
    %c0_5 = arith.constant 0 : index
    %c0_6 = arith.constant 0 : index
    %c0_7 = arith.constant 0 : index
    %16 = vector.load %arg4[%c0_5, %c0_6, %c0_7] : memref<1x24x128xf32, #tpu.memory_space<vmem>>, vector<1x1x128xf32>
    %17 = vector.shape_cast %16 : vector<1x1x128xf32> to vector<1x128xf32>
    %c0_8 = arith.constant 0 : index
    %c6 = arith.constant 6 : index
    %c0_9 = arith.constant 0 : index
    %18 = vector.load %arg4[%c0_8, %c6, %c0_9] : memref<1x24x128xf32, #tpu.memory_space<vmem>>, vector<1x1x128xf32>
    %19 = vector.shape_cast %18 : vector<1x1x128xf32> to vector<1x128xf32>
    %cst_10 = arith.constant dense<0.000000e+00> : vector<16xf32>
    %20 = vector.multi_reduction <add>, %14, %cst_10 [1] : vector<16x128xf32> to vector<16xf32>
    %21 = vector.shape_cast %20 : vector<16xf32> to vector<16x1xf32>
    %cst_11 = arith.constant 3.125000e-02 : f32
    %22 = vector.broadcast %cst_11 : f32 to vector<16x1xf32>
    %23 = arith.mulf %21, %22 : vector<16x1xf32>
    %24 = vector.broadcast %23 : vector<16x1xf32> to vector<16x128xf32>
    %25 = arith.subf %14, %24 : vector<16x128xf32>
    %26 = vector.broadcast %4 : vector<1x128xf32> to vector<16x128xf32>
    %27 = arith.mulf %25, %26 : vector<16x128xf32>
    %28 = arith.mulf %27, %27 : vector<16x128xf32>
    %cst_12 = arith.constant dense<0.000000e+00> : vector<16xf32>
    %29 = vector.multi_reduction <add>, %28, %cst_12 [1] : vector<16x128xf32> to vector<16xf32>
    %30 = vector.shape_cast %29 : vector<16xf32> to vector<16x1xf32>
    %cst_13 = arith.constant 3.125000e-02 : f32
    %31 = vector.broadcast %cst_13 : f32 to vector<16x1xf32>
    %32 = arith.mulf %30, %31 : vector<16x1xf32>
    %cst_14 = arith.constant 9.99999974E-6 : f32
    %33 = vector.broadcast %cst_14 : f32 to vector<16x1xf32>
    %34 = arith.addf %32, %33 : vector<16x1xf32>
    %35 = math.rsqrt %34 : vector<16x1xf32>
    %36 = vector.broadcast %35 : vector<16x1xf32> to vector<16x128xf32>
    %37 = arith.mulf %27, %36 : vector<16x128xf32>
    %38 = vector.broadcast %17 : vector<1x128xf32> to vector<16x128xf32>
    %39 = arith.mulf %37, %38 : vector<16x128xf32>
    %40 = vector.broadcast %19 : vector<1x128xf32> to vector<16x128xf32>
    %41 = arith.addf %39, %40 : vector<16x128xf32>
    %c0_15 = arith.constant 0 : index
    %c0_16 = arith.constant 0 : index
    %c0_17 = arith.constant 0 : index
    %42 = vector.load %arg5[%c0_15, %c0_16, %c0_17] : memref<1x256x128xf32, #tpu.memory_space<vmem>>, vector<1x32x128xf32>
    %43 = vector.shape_cast %42 : vector<1x32x128xf32> to vector<32x128xf32>
    %44 = vector.extract_strided_slice %41 {offsets = [0, 0], sizes = [16, 32], strides = [1, 1]} : vector<16x128xf32> to vector<16x32xf32>
    %cst_18 = arith.constant dense<0.000000e+00> : vector<16x128xf32>
    %45 = tpu.matmul %44, %43, %cst_18 {dimension_numbers = #tpu.dot_dimension_numbers<[1], [0], [0], [1], [0, 0, 1, 1], [], []>} : vector<16x32xf32>, vector<32x128xf32>, vector<16x128xf32> -> vector<16x128xf32>
    %c0_19 = arith.constant 0 : index
    %c12 = arith.constant 12 : index
    %c0_20 = arith.constant 0 : index
    %46 = vector.load %arg4[%c0_19, %c12, %c0_20] : memref<1x24x128xf32, #tpu.memory_space<vmem>>, vector<1x1x128xf32>
    %47 = vector.shape_cast %46 : vector<1x1x128xf32> to vector<1x128xf32>
    %48 = vector.broadcast %47 : vector<1x128xf32> to vector<16x128xf32>
    %49 = arith.addf %45, %48 : vector<16x128xf32>
    %c0_21 = arith.constant 0 : index
    %c32 = arith.constant 32 : index
    %c0_22 = arith.constant 0 : index
    %50 = vector.load %arg5[%c0_21, %c32, %c0_22] : memref<1x256x128xf32, #tpu.memory_space<vmem>>, vector<1x32x128xf32>
    %51 = vector.shape_cast %50 : vector<1x32x128xf32> to vector<32x128xf32>
    %52 = vector.extract_strided_slice %41 {offsets = [0, 0], sizes = [16, 32], strides = [1, 1]} : vector<16x128xf32> to vector<16x32xf32>
    %cst_23 = arith.constant dense<0.000000e+00> : vector<16x128xf32>
    %53 = tpu.matmul %52, %51, %cst_23 {dimension_numbers = #tpu.dot_dimension_numbers<[1], [0], [0], [1], [0, 0, 1, 1], [], []>} : vector<16x32xf32>, vector<32x128xf32>, vector<16x128xf32> -> vector<16x128xf32>
    %c0_24 = arith.constant 0 : index
    %c13 = arith.constant 13 : index
    %c0_25 = arith.constant 0 : index
    %54 = vector.load %arg4[%c0_24, %c13, %c0_25] : memref<1x24x128xf32, #tpu.memory_space<vmem>>, vector<1x1x128xf32>
    %55 = vector.shape_cast %54 : vector<1x1x128xf32> to vector<1x128xf32>
    %56 = vector.broadcast %55 : vector<1x128xf32> to vector<16x128xf32>
    %57 = arith.addf %53, %56 : vector<16x128xf32>
    %c0_26 = arith.constant 0 : index
    %c64 = arith.constant 64 : index
    %c0_27 = arith.constant 0 : index
    %58 = vector.load %arg5[%c0_26, %c64, %c0_27] : memref<1x256x128xf32, #tpu.memory_space<vmem>>, vector<1x32x128xf32>
    %59 = vector.shape_cast %58 : vector<1x32x128xf32> to vector<32x128xf32>
    %60 = vector.extract_strided_slice %41 {offsets = [0, 0], sizes = [16, 32], strides = [1, 1]} : vector<16x128xf32> to vector<16x32xf32>
    %cst_28 = arith.constant dense<0.000000e+00> : vector<16x128xf32>
    %61 = tpu.matmul %60, %59, %cst_28 {dimension_numbers = #tpu.dot_dimension_numbers<[1], [0], [0], [1], [0, 0, 1, 1], [], []>} : vector<16x32xf32>, vector<32x128xf32>, vector<16x128xf32> -> vector<16x128xf32>
    %c0_29 = arith.constant 0 : index
    %c14 = arith.constant 14 : index
    %c0_30 = arith.constant 0 : index
    %62 = vector.load %arg4[%c0_29, %c14, %c0_30] : memref<1x24x128xf32, #tpu.memory_space<vmem>>, vector<1x1x128xf32>
    %63 = vector.shape_cast %62 : vector<1x1x128xf32> to vector<1x128xf32>
    %64 = vector.broadcast %63 : vector<1x128xf32> to vector<16x128xf32>
    %65 = arith.addf %61, %64 : vector<16x128xf32>
    %66 = vector.extract_strided_slice %49 {offsets = [0, 0], sizes = [8, 32], strides = [1, 1]} : vector<16x128xf32> to vector<8x32xf32>
    %67 = vector.extract_strided_slice %57 {offsets = [0, 0], sizes = [8, 32], strides = [1, 1]} : vector<16x128xf32> to vector<8x32xf32>
    %68 = vector.extract_strided_slice %65 {offsets = [0, 0], sizes = [8, 128], strides = [1, 1]} : vector<16x128xf32> to vector<8x128xf32>
    %cst_31 = arith.constant dense<0.000000e+00> : vector<8x8xf32>
    %69 = tpu.matmul %66, %67, %cst_31 {dimension_numbers = #tpu.dot_dimension_numbers<[1], [1], [0], [0], [0, 0, 1, 0], [], []>} : vector<8x32xf32>, vector<8x32xf32>, vector<8x8xf32> -> vector<8x8xf32>
    %cst_32 = arith.constant dense<0xFF800000> : vector<8xf32>
    %70 = vector.multi_reduction <maximumf>, %69, %cst_32 [1] : vector<8x8xf32> to vector<8xf32>
    %71 = vector.shape_cast %70 : vector<8xf32> to vector<8x1xf32>
    %72 = vector.broadcast %71 : vector<8x1xf32> to vector<8x8xf32>
    %73 = arith.subf %69, %72 : vector<8x8xf32>
    %74 = math.exp %73 : vector<8x8xf32>
    %cst_33 = arith.constant dense<0.000000e+00> : vector<8xf32>
    %75 = vector.multi_reduction <add>, %74, %cst_33 [1] : vector<8x8xf32> to vector<8xf32>
    %76 = vector.shape_cast %75 : vector<8xf32> to vector<8x1xf32>
    %77 = tpu.reciprocal %76 : vector<8x1xf32> -> vector<8x1xf32>
    %78 = vector.broadcast %77 : vector<8x1xf32> to vector<8x8xf32>
    %79 = arith.mulf %74, %78 : vector<8x8xf32>
    %cst_34 = arith.constant dense<0.000000e+00> : vector<8x128xf32>
    %80 = tpu.matmul %79, %68, %cst_34 {dimension_numbers = #tpu.dot_dimension_numbers<[1], [0], [0], [1], [0, 0, 1, 1], [], []>} : vector<8x8xf32>, vector<8x128xf32>, vector<8x128xf32> -> vector<8x128xf32>
    %81 = vector.extract_strided_slice %49 {offsets = [8, 0], sizes = [8, 32], strides = [1, 1]} : vector<16x128xf32> to vector<8x32xf32>
    %82 = vector.extract_strided_slice %57 {offsets = [8, 0], sizes = [8, 32], strides = [1, 1]} : vector<16x128xf32> to vector<8x32xf32>
    %83 = vector.extract_strided_slice %65 {offsets = [8, 0], sizes = [8, 128], strides = [1, 1]} : vector<16x128xf32> to vector<8x128xf32>
    %cst_35 = arith.constant dense<0.000000e+00> : vector<8x8xf32>
    %84 = tpu.matmul %81, %82, %cst_35 {dimension_numbers = #tpu.dot_dimension_numbers<[1], [1], [0], [0], [0, 0, 1, 0], [], []>} : vector<8x32xf32>, vector<8x32xf32>, vector<8x8xf32> -> vector<8x8xf32>
    %cst_36 = arith.constant dense<0xFF800000> : vector<8xf32>
    %85 = vector.multi_reduction <maximumf>, %84, %cst_36 [1] : vector<8x8xf32> to vector<8xf32>
    %86 = vector.shape_cast %85 : vector<8xf32> to vector<8x1xf32>
    %87 = vector.broadcast %86 : vector<8x1xf32> to vector<8x8xf32>
    %88 = arith.subf %84, %87 : vector<8x8xf32>
    %89 = math.exp %88 : vector<8x8xf32>
    %cst_37 = arith.constant dense<0.000000e+00> : vector<8xf32>
    %90 = vector.multi_reduction <add>, %89, %cst_37 [1] : vector<8x8xf32> to vector<8xf32>
    %91 = vector.shape_cast %90 : vector<8xf32> to vector<8x1xf32>
    %92 = tpu.reciprocal %91 : vector<8x1xf32> -> vector<8x1xf32>
    %93 = vector.broadcast %92 : vector<8x1xf32> to vector<8x8xf32>
    %94 = arith.mulf %89, %93 : vector<8x8xf32>
    %cst_38 = arith.constant dense<0.000000e+00> : vector<8x128xf32>
    %95 = tpu.matmul %94, %83, %cst_38 {dimension_numbers = #tpu.dot_dimension_numbers<[1], [0], [0], [1], [0, 0, 1, 1], [], []>} : vector<8x8xf32>, vector<8x128xf32>, vector<8x128xf32> -> vector<8x128xf32>
    %96 = tpu.concatenate %80, %95 in 0 : vector<8x128xf32>, vector<8x128xf32> -> vector<16x128xf32>
    %c0_39 = arith.constant 0 : index
    %c1 = arith.constant 1 : index
    %c0_40 = arith.constant 0 : index
    %97 = vector.load %arg4[%c0_39, %c1, %c0_40] : memref<1x24x128xf32, #tpu.memory_space<vmem>>, vector<1x1x128xf32>
    %98 = vector.shape_cast %97 : vector<1x1x128xf32> to vector<1x128xf32>
    %c0_41 = arith.constant 0 : index
    %c7 = arith.constant 7 : index
    %c0_42 = arith.constant 0 : index
    %99 = vector.load %arg4[%c0_41, %c7, %c0_42] : memref<1x24x128xf32, #tpu.memory_space<vmem>>, vector<1x1x128xf32>
    %100 = vector.shape_cast %99 : vector<1x1x128xf32> to vector<1x128xf32>
    %cst_43 = arith.constant dense<0.000000e+00> : vector<16xf32>
    %101 = vector.multi_reduction <add>, %96, %cst_43 [1] : vector<16x128xf32> to vector<16xf32>
    %102 = vector.shape_cast %101 : vector<16xf32> to vector<16x1xf32>
    %cst_44 = arith.constant 3.125000e-02 : f32
    %103 = vector.broadcast %cst_44 : f32 to vector<16x1xf32>
    %104 = arith.mulf %102, %103 : vector<16x1xf32>
    %105 = vector.broadcast %104 : vector<16x1xf32> to vector<16x128xf32>
    %106 = arith.subf %96, %105 : vector<16x128xf32>
    %107 = vector.broadcast %4 : vector<1x128xf32> to vector<16x128xf32>
    %108 = arith.mulf %106, %107 : vector<16x128xf32>
    %109 = arith.mulf %108, %108 : vector<16x128xf32>
    %cst_45 = arith.constant dense<0.000000e+00> : vector<16xf32>
    %110 = vector.multi_reduction <add>, %109, %cst_45 [1] : vector<16x128xf32> to vector<16xf32>
    %111 = vector.shape_cast %110 : vector<16xf32> to vector<16x1xf32>
    %cst_46 = arith.constant 3.125000e-02 : f32
    %112 = vector.broadcast %cst_46 : f32 to vector<16x1xf32>
    %113 = arith.mulf %111, %112 : vector<16x1xf32>
    %cst_47 = arith.constant 9.99999974E-6 : f32
    %114 = vector.broadcast %cst_47 : f32 to vector<16x1xf32>
    %115 = arith.addf %113, %114 : vector<16x1xf32>
    %116 = math.rsqrt %115 : vector<16x1xf32>
    %117 = vector.broadcast %116 : vector<16x1xf32> to vector<16x128xf32>
    %118 = arith.mulf %108, %117 : vector<16x128xf32>
    %119 = vector.broadcast %98 : vector<1x128xf32> to vector<16x128xf32>
    %120 = arith.mulf %118, %119 : vector<16x128xf32>
    %121 = vector.broadcast %100 : vector<1x128xf32> to vector<16x128xf32>
    %122 = arith.addf %120, %121 : vector<16x128xf32>
    %c0_48 = arith.constant 0 : index
    %c96 = arith.constant 96 : index
    %c0_49 = arith.constant 0 : index
    %123 = vector.load %arg5[%c0_48, %c96, %c0_49] : memref<1x256x128xf32, #tpu.memory_space<vmem>>, vector<1x32x128xf32>
    %124 = vector.shape_cast %123 : vector<1x32x128xf32> to vector<32x128xf32>
    %125 = vector.extract_strided_slice %122 {offsets = [0, 0], sizes = [16, 32], strides = [1, 1]} : vector<16x128xf32> to vector<16x32xf32>
    %cst_50 = arith.constant dense<0.000000e+00> : vector<16x128xf32>
    %126 = tpu.matmul %125, %124, %cst_50 {dimension_numbers = #tpu.dot_dimension_numbers<[1], [0], [0], [1], [0, 0, 1, 1], [], []>} : vector<16x32xf32>, vector<32x128xf32>, vector<16x128xf32> -> vector<16x128xf32>
    %c0_51 = arith.constant 0 : index
    %c15 = arith.constant 15 : index
    %c0_52 = arith.constant 0 : index
    %127 = vector.load %arg4[%c0_51, %c15, %c0_52] : memref<1x24x128xf32, #tpu.memory_space<vmem>>, vector<1x1x128xf32>
    %128 = vector.shape_cast %127 : vector<1x1x128xf32> to vector<1x128xf32>
    %129 = vector.broadcast %128 : vector<1x128xf32> to vector<16x128xf32>
    %130 = arith.addf %126, %129 : vector<16x128xf32>
    %131 = arith.addf %14, %130 : vector<16x128xf32>
    %c0_53 = arith.constant 0 : index
    %c2 = arith.constant 2 : index
    %c0_54 = arith.constant 0 : index
    %132 = vector.load %arg4[%c0_53, %c2, %c0_54] : memref<1x24x128xf32, #tpu.memory_space<vmem>>, vector<1x1x128xf32>
    %133 = vector.shape_cast %132 : vector<1x1x128xf32> to vector<1x128xf32>
    %c0_55 = arith.constant 0 : index
    %c8 = arith.constant 8 : index
    %c0_56 = arith.constant 0 : index
    %134 = vector.load %arg4[%c0_55, %c8, %c0_56] : memref<1x24x128xf32, #tpu.memory_space<vmem>>, vector<1x1x128xf32>
    %135 = vector.shape_cast %134 : vector<1x1x128xf32> to vector<1x128xf32>
    %cst_57 = arith.constant dense<0.000000e+00> : vector<16xf32>
    %136 = vector.multi_reduction <add>, %131, %cst_57 [1] : vector<16x128xf32> to vector<16xf32>
    %137 = vector.shape_cast %136 : vector<16xf32> to vector<16x1xf32>
    %cst_58 = arith.constant 3.125000e-02 : f32
    %138 = vector.broadcast %cst_58 : f32 to vector<16x1xf32>
    %139 = arith.mulf %137, %138 : vector<16x1xf32>
    %140 = vector.broadcast %139 : vector<16x1xf32> to vector<16x128xf32>
    %141 = arith.subf %131, %140 : vector<16x128xf32>
    %142 = vector.broadcast %4 : vector<1x128xf32> to vector<16x128xf32>
    %143 = arith.mulf %141, %142 : vector<16x128xf32>
    %144 = arith.mulf %143, %143 : vector<16x128xf32>
    %cst_59 = arith.constant dense<0.000000e+00> : vector<16xf32>
    %145 = vector.multi_reduction <add>, %144, %cst_59 [1] : vector<16x128xf32> to vector<16xf32>
    %146 = vector.shape_cast %145 : vector<16xf32> to vector<16x1xf32>
    %cst_60 = arith.constant 3.125000e-02 : f32
    %147 = vector.broadcast %cst_60 : f32 to vector<16x1xf32>
    %148 = arith.mulf %146, %147 : vector<16x1xf32>
    %cst_61 = arith.constant 9.99999974E-6 : f32
    %149 = vector.broadcast %cst_61 : f32 to vector<16x1xf32>
    %150 = arith.addf %148, %149 : vector<16x1xf32>
    %151 = math.rsqrt %150 : vector<16x1xf32>
    %152 = vector.broadcast %151 : vector<16x1xf32> to vector<16x128xf32>
    %153 = arith.mulf %143, %152 : vector<16x128xf32>
    %154 = vector.broadcast %133 : vector<1x128xf32> to vector<16x128xf32>
    %155 = arith.mulf %153, %154 : vector<16x128xf32>
    %156 = vector.broadcast %135 : vector<1x128xf32> to vector<16x128xf32>
    %157 = arith.addf %155, %156 : vector<16x128xf32>
    %c0_62 = arith.constant 0 : index
    %c3 = arith.constant 3 : index
    %c0_63 = arith.constant 0 : index
    %158 = vector.load %arg4[%c0_62, %c3, %c0_63] : memref<1x24x128xf32, #tpu.memory_space<vmem>>, vector<1x1x128xf32>
    %159 = vector.shape_cast %158 : vector<1x1x128xf32> to vector<1x128xf32>
    %c0_64 = arith.constant 0 : index
    %c9 = arith.constant 9 : index
    %c0_65 = arith.constant 0 : index
    %160 = vector.load %arg4[%c0_64, %c9, %c0_65] : memref<1x24x128xf32, #tpu.memory_space<vmem>>, vector<1x1x128xf32>
    %161 = vector.shape_cast %160 : vector<1x1x128xf32> to vector<1x128xf32>
    %cst_66 = arith.constant dense<0.000000e+00> : vector<32xf32>
    %162 = vector.multi_reduction <add>, %15, %cst_66 [1] : vector<32x128xf32> to vector<32xf32>
    %163 = vector.shape_cast %162 : vector<32xf32> to vector<32x1xf32>
    %cst_67 = arith.constant 3.125000e-02 : f32
    %164 = vector.broadcast %cst_67 : f32 to vector<32x1xf32>
    %165 = arith.mulf %163, %164 : vector<32x1xf32>
    %166 = vector.broadcast %165 : vector<32x1xf32> to vector<32x128xf32>
    %167 = arith.subf %15, %166 : vector<32x128xf32>
    %168 = vector.broadcast %4 : vector<1x128xf32> to vector<32x128xf32>
    %169 = arith.mulf %167, %168 : vector<32x128xf32>
    %170 = arith.mulf %169, %169 : vector<32x128xf32>
    %cst_68 = arith.constant dense<0.000000e+00> : vector<32xf32>
    %171 = vector.multi_reduction <add>, %170, %cst_68 [1] : vector<32x128xf32> to vector<32xf32>
    %172 = vector.shape_cast %171 : vector<32xf32> to vector<32x1xf32>
    %cst_69 = arith.constant 3.125000e-02 : f32
    %173 = vector.broadcast %cst_69 : f32 to vector<32x1xf32>
    %174 = arith.mulf %172, %173 : vector<32x1xf32>
    %cst_70 = arith.constant 9.99999974E-6 : f32
    %175 = vector.broadcast %cst_70 : f32 to vector<32x1xf32>
    %176 = arith.addf %174, %175 : vector<32x1xf32>
    %177 = math.rsqrt %176 : vector<32x1xf32>
    %178 = vector.broadcast %177 : vector<32x1xf32> to vector<32x128xf32>
    %179 = arith.mulf %169, %178 : vector<32x128xf32>
    %180 = vector.broadcast %159 : vector<1x128xf32> to vector<32x128xf32>
    %181 = arith.mulf %179, %180 : vector<32x128xf32>
    %182 = vector.broadcast %161 : vector<1x128xf32> to vector<32x128xf32>
    %183 = arith.addf %181, %182 : vector<32x128xf32>
    %c0_71 = arith.constant 0 : index
    %c128 = arith.constant 128 : index
    %c0_72 = arith.constant 0 : index
    %184 = vector.load %arg5[%c0_71, %c128, %c0_72] : memref<1x256x128xf32, #tpu.memory_space<vmem>>, vector<1x32x128xf32>
    %185 = vector.shape_cast %184 : vector<1x32x128xf32> to vector<32x128xf32>
    %186 = vector.extract_strided_slice %157 {offsets = [0, 0], sizes = [16, 32], strides = [1, 1]} : vector<16x128xf32> to vector<16x32xf32>
    %cst_73 = arith.constant dense<0.000000e+00> : vector<16x128xf32>
    %187 = tpu.matmul %186, %185, %cst_73 {dimension_numbers = #tpu.dot_dimension_numbers<[1], [0], [0], [1], [0, 0, 1, 1], [], []>} : vector<16x32xf32>, vector<32x128xf32>, vector<16x128xf32> -> vector<16x128xf32>
    %c0_74 = arith.constant 0 : index
    %c16 = arith.constant 16 : index
    %c0_75 = arith.constant 0 : index
    %188 = vector.load %arg4[%c0_74, %c16, %c0_75] : memref<1x24x128xf32, #tpu.memory_space<vmem>>, vector<1x1x128xf32>
    %189 = vector.shape_cast %188 : vector<1x1x128xf32> to vector<1x128xf32>
    %190 = vector.broadcast %189 : vector<1x128xf32> to vector<16x128xf32>
    %191 = arith.addf %187, %190 : vector<16x128xf32>
    %c0_76 = arith.constant 0 : index
    %c160 = arith.constant 160 : index
    %c0_77 = arith.constant 0 : index
    %192 = vector.load %arg5[%c0_76, %c160, %c0_77] : memref<1x256x128xf32, #tpu.memory_space<vmem>>, vector<1x32x128xf32>
    %193 = vector.shape_cast %192 : vector<1x32x128xf32> to vector<32x128xf32>
    %194 = vector.extract_strided_slice %183 {offsets = [0, 0], sizes = [32, 32], strides = [1, 1]} : vector<32x128xf32> to vector<32x32xf32>
    %cst_78 = arith.constant dense<0.000000e+00> : vector<32x128xf32>
    %195 = tpu.matmul %194, %193, %cst_78 {dimension_numbers = #tpu.dot_dimension_numbers<[1], [0], [0], [1], [0, 0, 1, 1], [], []>} : vector<32x32xf32>, vector<32x128xf32>, vector<32x128xf32> -> vector<32x128xf32>
    %c0_79 = arith.constant 0 : index
    %c17 = arith.constant 17 : index
    %c0_80 = arith.constant 0 : index
    %196 = vector.load %arg4[%c0_79, %c17, %c0_80] : memref<1x24x128xf32, #tpu.memory_space<vmem>>, vector<1x1x128xf32>
    %197 = vector.shape_cast %196 : vector<1x1x128xf32> to vector<1x128xf32>
    %198 = vector.broadcast %197 : vector<1x128xf32> to vector<32x128xf32>
    %199 = arith.addf %195, %198 : vector<32x128xf32>
    %c0_81 = arith.constant 0 : index
    %c192 = arith.constant 192 : index
    %c0_82 = arith.constant 0 : index
    %200 = vector.load %arg5[%c0_81, %c192, %c0_82] : memref<1x256x128xf32, #tpu.memory_space<vmem>>, vector<1x32x128xf32>
    %201 = vector.shape_cast %200 : vector<1x32x128xf32> to vector<32x128xf32>
    %202 = vector.extract_strided_slice %183 {offsets = [0, 0], sizes = [32, 32], strides = [1, 1]} : vector<32x128xf32> to vector<32x32xf32>
    %cst_83 = arith.constant dense<0.000000e+00> : vector<32x128xf32>
    %203 = tpu.matmul %202, %201, %cst_83 {dimension_numbers = #tpu.dot_dimension_numbers<[1], [0], [0], [1], [0, 0, 1, 1], [], []>} : vector<32x32xf32>, vector<32x128xf32>, vector<32x128xf32> -> vector<32x128xf32>
    %c0_84 = arith.constant 0 : index
    %c18 = arith.constant 18 : index
    %c0_85 = arith.constant 0 : index
    %204 = vector.load %arg4[%c0_84, %c18, %c0_85] : memref<1x24x128xf32, #tpu.memory_space<vmem>>, vector<1x1x128xf32>
    %205 = vector.shape_cast %204 : vector<1x1x128xf32> to vector<1x128xf32>
    %206 = vector.broadcast %205 : vector<1x128xf32> to vector<32x128xf32>
    %207 = arith.addf %203, %206 : vector<32x128xf32>
    %208 = vector.extract_strided_slice %191 {offsets = [0, 0], sizes = [8, 32], strides = [1, 1]} : vector<16x128xf32> to vector<8x32xf32>
    %209 = vector.extract_strided_slice %199 {offsets = [0, 0], sizes = [16, 32], strides = [1, 1]} : vector<32x128xf32> to vector<16x32xf32>
    %210 = vector.extract_strided_slice %207 {offsets = [0, 0], sizes = [16, 128], strides = [1, 1]} : vector<32x128xf32> to vector<16x128xf32>
    %cst_86 = arith.constant dense<0.000000e+00> : vector<8x16xf32>
    %211 = tpu.matmul %208, %209, %cst_86 {dimension_numbers = #tpu.dot_dimension_numbers<[1], [1], [0], [0], [0, 0, 1, 0], [], []>} : vector<8x32xf32>, vector<16x32xf32>, vector<8x16xf32> -> vector<8x16xf32>
    %212 = vector.broadcast %10 : vector<1x16xf32> to vector<8x16xf32>
    %213 = arith.addf %211, %212 : vector<8x16xf32>
    %cst_87 = arith.constant dense<0xFF800000> : vector<8xf32>
    %214 = vector.multi_reduction <maximumf>, %213, %cst_87 [1] : vector<8x16xf32> to vector<8xf32>
    %215 = vector.shape_cast %214 : vector<8xf32> to vector<8x1xf32>
    %216 = vector.broadcast %215 : vector<8x1xf32> to vector<8x16xf32>
    %217 = arith.subf %213, %216 : vector<8x16xf32>
    %218 = math.exp %217 : vector<8x16xf32>
    %cst_88 = arith.constant dense<0.000000e+00> : vector<8xf32>
    %219 = vector.multi_reduction <add>, %218, %cst_88 [1] : vector<8x16xf32> to vector<8xf32>
    %220 = vector.shape_cast %219 : vector<8xf32> to vector<8x1xf32>
    %221 = tpu.reciprocal %220 : vector<8x1xf32> -> vector<8x1xf32>
    %222 = vector.broadcast %221 : vector<8x1xf32> to vector<8x16xf32>
    %223 = arith.mulf %218, %222 : vector<8x16xf32>
    %cst_89 = arith.constant dense<0.000000e+00> : vector<8x128xf32>
    %224 = tpu.matmul %223, %210, %cst_89 {dimension_numbers = #tpu.dot_dimension_numbers<[1], [0], [0], [1], [0, 0, 1, 1], [], []>} : vector<8x16xf32>, vector<16x128xf32>, vector<8x128xf32> -> vector<8x128xf32>
    %225 = vector.extract_strided_slice %191 {offsets = [8, 0], sizes = [8, 32], strides = [1, 1]} : vector<16x128xf32> to vector<8x32xf32>
    %226 = vector.extract_strided_slice %199 {offsets = [16, 0], sizes = [16, 32], strides = [1, 1]} : vector<32x128xf32> to vector<16x32xf32>
    %227 = vector.extract_strided_slice %207 {offsets = [16, 0], sizes = [16, 128], strides = [1, 1]} : vector<32x128xf32> to vector<16x128xf32>
    %cst_90 = arith.constant dense<0.000000e+00> : vector<8x16xf32>
    %228 = tpu.matmul %225, %226, %cst_90 {dimension_numbers = #tpu.dot_dimension_numbers<[1], [1], [0], [0], [0, 0, 1, 0], [], []>} : vector<8x32xf32>, vector<16x32xf32>, vector<8x16xf32> -> vector<8x16xf32>
    %229 = vector.broadcast %10 : vector<1x16xf32> to vector<8x16xf32>
    %230 = arith.addf %228, %229 : vector<8x16xf32>
    %cst_91 = arith.constant dense<0xFF800000> : vector<8xf32>
    %231 = vector.multi_reduction <maximumf>, %230, %cst_91 [1] : vector<8x16xf32> to vector<8xf32>
    %232 = vector.shape_cast %231 : vector<8xf32> to vector<8x1xf32>
    %233 = vector.broadcast %232 : vector<8x1xf32> to vector<8x16xf32>
    %234 = arith.subf %230, %233 : vector<8x16xf32>
    %235 = math.exp %234 : vector<8x16xf32>
    %cst_92 = arith.constant dense<0.000000e+00> : vector<8xf32>
    %236 = vector.multi_reduction <add>, %235, %cst_92 [1] : vector<8x16xf32> to vector<8xf32>
    %237 = vector.shape_cast %236 : vector<8xf32> to vector<8x1xf32>
    %238 = tpu.reciprocal %237 : vector<8x1xf32> -> vector<8x1xf32>
    %239 = vector.broadcast %238 : vector<8x1xf32> to vector<8x16xf32>
    %240 = arith.mulf %235, %239 : vector<8x16xf32>
    %cst_93 = arith.constant dense<0.000000e+00> : vector<8x128xf32>
    %241 = tpu.matmul %240, %227, %cst_93 {dimension_numbers = #tpu.dot_dimension_numbers<[1], [0], [0], [1], [0, 0, 1, 1], [], []>} : vector<8x16xf32>, vector<16x128xf32>, vector<8x128xf32> -> vector<8x128xf32>
    %242 = tpu.concatenate %224, %241 in 0 : vector<8x128xf32>, vector<8x128xf32> -> vector<16x128xf32>
    %c0_94 = arith.constant 0 : index
    %c4 = arith.constant 4 : index
    %c0_95 = arith.constant 0 : index
    %243 = vector.load %arg4[%c0_94, %c4, %c0_95] : memref<1x24x128xf32, #tpu.memory_space<vmem>>, vector<1x1x128xf32>
    %244 = vector.shape_cast %243 : vector<1x1x128xf32> to vector<1x128xf32>
    %c0_96 = arith.constant 0 : index
    %c10 = arith.constant 10 : index
    %c0_97 = arith.constant 0 : index
    %245 = vector.load %arg4[%c0_96, %c10, %c0_97] : memref<1x24x128xf32, #tpu.memory_space<vmem>>, vector<1x1x128xf32>
    %246 = vector.shape_cast %245 : vector<1x1x128xf32> to vector<1x128xf32>
    %cst_98 = arith.constant dense<0.000000e+00> : vector<16xf32>
    %247 = vector.multi_reduction <add>, %242, %cst_98 [1] : vector<16x128xf32> to vector<16xf32>
    %248 = vector.shape_cast %247 : vector<16xf32> to vector<16x1xf32>
    %cst_99 = arith.constant 3.125000e-02 : f32
    %249 = vector.broadcast %cst_99 : f32 to vector<16x1xf32>
    %250 = arith.mulf %248, %249 : vector<16x1xf32>
    %251 = vector.broadcast %250 : vector<16x1xf32> to vector<16x128xf32>
    %252 = arith.subf %242, %251 : vector<16x128xf32>
    %253 = vector.broadcast %4 : vector<1x128xf32> to vector<16x128xf32>
    %254 = arith.mulf %252, %253 : vector<16x128xf32>
    %255 = arith.mulf %254, %254 : vector<16x128xf32>
    %cst_100 = arith.constant dense<0.000000e+00> : vector<16xf32>
    %256 = vector.multi_reduction <add>, %255, %cst_100 [1] : vector<16x128xf32> to vector<16xf32>
    %257 = vector.shape_cast %256 : vector<16xf32> to vector<16x1xf32>
    %cst_101 = arith.constant 3.125000e-02 : f32
    %258 = vector.broadcast %cst_101 : f32 to vector<16x1xf32>
    %259 = arith.mulf %257, %258 : vector<16x1xf32>
    %cst_102 = arith.constant 9.99999974E-6 : f32
    %260 = vector.broadcast %cst_102 : f32 to vector<16x1xf32>
    %261 = arith.addf %259, %260 : vector<16x1xf32>
    %262 = math.rsqrt %261 : vector<16x1xf32>
    %263 = vector.broadcast %262 : vector<16x1xf32> to vector<16x128xf32>
    %264 = arith.mulf %254, %263 : vector<16x128xf32>
    %265 = vector.broadcast %244 : vector<1x128xf32> to vector<16x128xf32>
    %266 = arith.mulf %264, %265 : vector<16x128xf32>
    %267 = vector.broadcast %246 : vector<1x128xf32> to vector<16x128xf32>
    %268 = arith.addf %266, %267 : vector<16x128xf32>
    %c0_103 = arith.constant 0 : index
    %c224 = arith.constant 224 : index
    %c0_104 = arith.constant 0 : index
    %269 = vector.load %arg5[%c0_103, %c224, %c0_104] : memref<1x256x128xf32, #tpu.memory_space<vmem>>, vector<1x32x128xf32>
    %270 = vector.shape_cast %269 : vector<1x32x128xf32> to vector<32x128xf32>
    %271 = vector.extract_strided_slice %268 {offsets = [0, 0], sizes = [16, 32], strides = [1, 1]} : vector<16x128xf32> to vector<16x32xf32>
    %cst_105 = arith.constant dense<0.000000e+00> : vector<16x128xf32>
    %272 = tpu.matmul %271, %270, %cst_105 {dimension_numbers = #tpu.dot_dimension_numbers<[1], [0], [0], [1], [0, 0, 1, 1], [], []>} : vector<16x32xf32>, vector<32x128xf32>, vector<16x128xf32> -> vector<16x128xf32>
    %c0_106 = arith.constant 0 : index
    %c19 = arith.constant 19 : index
    %c0_107 = arith.constant 0 : index
    %273 = vector.load %arg4[%c0_106, %c19, %c0_107] : memref<1x24x128xf32, #tpu.memory_space<vmem>>, vector<1x1x128xf32>
    %274 = vector.shape_cast %273 : vector<1x1x128xf32> to vector<1x128xf32>
    %275 = vector.broadcast %274 : vector<1x128xf32> to vector<16x128xf32>
    %276 = arith.addf %272, %275 : vector<16x128xf32>
    %277 = arith.addf %131, %276 : vector<16x128xf32>
    %c0_108 = arith.constant 0 : index
    %c5 = arith.constant 5 : index
    %c0_109 = arith.constant 0 : index
    %278 = vector.load %arg4[%c0_108, %c5, %c0_109] : memref<1x24x128xf32, #tpu.memory_space<vmem>>, vector<1x1x128xf32>
    %279 = vector.shape_cast %278 : vector<1x1x128xf32> to vector<1x128xf32>
    %c0_110 = arith.constant 0 : index
    %c11 = arith.constant 11 : index
    %c0_111 = arith.constant 0 : index
    %280 = vector.load %arg4[%c0_110, %c11, %c0_111] : memref<1x24x128xf32, #tpu.memory_space<vmem>>, vector<1x1x128xf32>
    %281 = vector.shape_cast %280 : vector<1x1x128xf32> to vector<1x128xf32>
    %cst_112 = arith.constant dense<0.000000e+00> : vector<16xf32>
    %282 = vector.multi_reduction <add>, %277, %cst_112 [1] : vector<16x128xf32> to vector<16xf32>
    %283 = vector.shape_cast %282 : vector<16xf32> to vector<16x1xf32>
    %cst_113 = arith.constant 3.125000e-02 : f32
    %284 = vector.broadcast %cst_113 : f32 to vector<16x1xf32>
    %285 = arith.mulf %283, %284 : vector<16x1xf32>
    %286 = vector.broadcast %285 : vector<16x1xf32> to vector<16x128xf32>
    %287 = arith.subf %277, %286 : vector<16x128xf32>
    %288 = vector.broadcast %4 : vector<1x128xf32> to vector<16x128xf32>
    %289 = arith.mulf %287, %288 : vector<16x128xf32>
    %290 = arith.mulf %289, %289 : vector<16x128xf32>
    %cst_114 = arith.constant dense<0.000000e+00> : vector<16xf32>
    %291 = vector.multi_reduction <add>, %290, %cst_114 [1] : vector<16x128xf32> to vector<16xf32>
    %292 = vector.shape_cast %291 : vector<16xf32> to vector<16x1xf32>
    %cst_115 = arith.constant 3.125000e-02 : f32
    %293 = vector.broadcast %cst_115 : f32 to vector<16x1xf32>
    %294 = arith.mulf %292, %293 : vector<16x1xf32>
    %cst_116 = arith.constant 9.99999974E-6 : f32
    %295 = vector.broadcast %cst_116 : f32 to vector<16x1xf32>
    %296 = arith.addf %294, %295 : vector<16x1xf32>
    %297 = math.rsqrt %296 : vector<16x1xf32>
    %298 = vector.broadcast %297 : vector<16x1xf32> to vector<16x128xf32>
    %299 = arith.mulf %289, %298 : vector<16x128xf32>
    %300 = vector.broadcast %279 : vector<1x128xf32> to vector<16x128xf32>
    %301 = arith.mulf %299, %300 : vector<16x128xf32>
    %302 = vector.broadcast %281 : vector<1x128xf32> to vector<16x128xf32>
    %303 = arith.addf %301, %302 : vector<16x128xf32>
    %304 = vector.extract_strided_slice %303 {offsets = [0, 0], sizes = [16, 32], strides = [1, 1]} : vector<16x128xf32> to vector<16x32xf32>
    %c0_117 = arith.constant 0 : index
    %c0_118 = arith.constant 0 : index
    %c0_119 = arith.constant 0 : index
    %305 = vector.load %arg6[%c0_117, %c0_118, %c0_119] : memref<1x32x128xf32, #tpu.memory_space<vmem>>, vector<1x32x128xf32>
    %306 = vector.shape_cast %305 : vector<1x32x128xf32> to vector<32x128xf32>
    %cst_120 = arith.constant dense<0.000000e+00> : vector<16x128xf32>
    %307 = tpu.matmul %304, %306, %cst_120 {dimension_numbers = #tpu.dot_dimension_numbers<[1], [0], [0], [1], [0, 0, 1, 1], [], []>} : vector<16x32xf32>, vector<32x128xf32>, vector<16x128xf32> -> vector<16x128xf32>
    %c0_121 = arith.constant 0 : index
    %c0_122 = arith.constant 0 : index
    %c0_123 = arith.constant 0 : index
    %308 = vector.load %arg7[%c0_121, %c0_122, %c0_123] : memref<1x1x128xf32, #tpu.memory_space<vmem>>, vector<1x1x128xf32>
    %309 = vector.shape_cast %308 : vector<1x1x128xf32> to vector<1x128xf32>
    %310 = vector.broadcast %309 : vector<1x128xf32> to vector<16x128xf32>
    %311 = arith.addf %307, %310 : vector<16x128xf32>
    %cst_124 = arith.constant 0.000000e+00 : f32
    %312 = vector.broadcast %cst_124 : f32 to vector<16x128xf32>
    %313 = arith.cmpf ogt, %311, %312 : vector<16x128xf32>
    %cst_125 = arith.constant 1.000000e-01 : f32
    %314 = vector.broadcast %cst_125 : f32 to vector<16x128xf32>
    %315 = arith.mulf %314, %311 : vector<16x128xf32>
    %316 = arith.select %313, %311, %315 : vector<16x128xi1>, vector<16x128xf32>
    %317 = vector.extract_strided_slice %316 {offsets = [0, 0], sizes = [16, 32], strides = [1, 1]} : vector<16x128xf32> to vector<16x32xf32>
    %c0_126 = arith.constant 0 : index
    %c0_127 = arith.constant 0 : index
    %c0_128 = arith.constant 0 : index
    %318 = vector.load %arg8[%c0_126, %c0_127, %c0_128] : memref<1x32x128xf32, #tpu.memory_space<vmem>>, vector<1x32x128xf32>
    %319 = vector.shape_cast %318 : vector<1x32x128xf32> to vector<32x128xf32>
    %cst_129 = arith.constant dense<0.000000e+00> : vector<16x128xf32>
    %320 = tpu.matmul %317, %319, %cst_129 {dimension_numbers = #tpu.dot_dimension_numbers<[1], [0], [0], [1], [0, 0, 1, 1], [], []>} : vector<16x32xf32>, vector<32x128xf32>, vector<16x128xf32> -> vector<16x128xf32>
    %c0_130 = arith.constant 0 : index
    %c20 = arith.constant 20 : index
    %c0_131 = arith.constant 0 : index
    %321 = vector.load %arg4[%c0_130, %c20, %c0_131] : memref<1x24x128xf32, #tpu.memory_space<vmem>>, vector<1x1x128xf32>
    %322 = vector.shape_cast %321 : vector<1x1x128xf32> to vector<1x128xf32>
    %323 = vector.broadcast %322 : vector<1x128xf32> to vector<16x128xf32>
    %324 = arith.addf %320, %323 : vector<16x128xf32>
    %325 = arith.addf %277, %324 : vector<16x128xf32>
    %c0_132 = arith.constant 0 : index
    %c0_133 = arith.constant 0 : index
    %326 = vector.load %arg10[%c0_132, %c0_133] : memref<16x128xf32, #tpu.memory_space<vmem>>, vector<16x128xf32>
    tpu.vector_store %arg10[%c0_132, %c0_133], %325 {strides = array<i32>} : memref<16x128xf32, #tpu.memory_space<vmem>>, vector<16x128xf32>,
    %c2_i32 = arith.constant 2 : i32
    %327 = arith.cmpi eq, %arg1, %c2_i32 : i32
    %328 = arith.extui %327 : i1 to i32
    %c0_i32_134 = arith.constant 0 : i32
    %329 = arith.cmpi ne, %328, %c0_i32_134 : i32
    scf.if %329 {
      %c0_135 = arith.constant 0 : index
      %c21 = arith.constant 21 : index
      %c0_136 = arith.constant 0 : index
      %330 = vector.load %arg4[%c0_135, %c21, %c0_136] : memref<1x24x128xf32, #tpu.memory_space<vmem>>, vector<1x1x128xf32>
      %331 = vector.shape_cast %330 : vector<1x1x128xf32> to vector<1x128xf32>
      %c0_137 = arith.constant 0 : index
      %c22 = arith.constant 22 : index
      %c0_138 = arith.constant 0 : index
      %332 = vector.load %arg4[%c0_137, %c22, %c0_138] : memref<1x24x128xf32, #tpu.memory_space<vmem>>, vector<1x1x128xf32>
      %333 = vector.shape_cast %332 : vector<1x1x128xf32> to vector<1x128xf32>
      %cst_139 = arith.constant dense<0.000000e+00> : vector<16xf32>
      %334 = vector.multi_reduction <add>, %325, %cst_139 [1] : vector<16x128xf32> to vector<16xf32>
      %335 = vector.shape_cast %334 : vector<16xf32> to vector<16x1xf32>
      %cst_140 = arith.constant 3.125000e-02 : f32
      %336 = vector.broadcast %cst_140 : f32 to vector<16x1xf32>
      %337 = arith.mulf %335, %336 : vector<16x1xf32>
      %338 = vector.broadcast %337 : vector<16x1xf32> to vector<16x128xf32>
      %339 = arith.subf %325, %338 : vector<16x128xf32>
      %340 = vector.broadcast %4 : vector<1x128xf32> to vector<16x128xf32>
      %341 = arith.mulf %339, %340 : vector<16x128xf32>
      %342 = arith.mulf %341, %341 : vector<16x128xf32>
      %cst_141 = arith.constant dense<0.000000e+00> : vector<16xf32>
      %343 = vector.multi_reduction <add>, %342, %cst_141 [1] : vector<16x128xf32> to vector<16xf32>
      %344 = vector.shape_cast %343 : vector<16xf32> to vector<16x1xf32>
      %cst_142 = arith.constant 3.125000e-02 : f32
      %345 = vector.broadcast %cst_142 : f32 to vector<16x1xf32>
      %346 = arith.mulf %344, %345 : vector<16x1xf32>
      %cst_143 = arith.constant 9.99999974E-6 : f32
      %347 = vector.broadcast %cst_143 : f32 to vector<16x1xf32>
      %348 = arith.addf %346, %347 : vector<16x1xf32>
      %349 = math.rsqrt %348 : vector<16x1xf32>
      %350 = vector.broadcast %349 : vector<16x1xf32> to vector<16x128xf32>
      %351 = arith.mulf %341, %350 : vector<16x128xf32>
      %352 = vector.broadcast %331 : vector<1x128xf32> to vector<16x128xf32>
      %353 = arith.mulf %351, %352 : vector<16x128xf32>
      %354 = vector.broadcast %333 : vector<1x128xf32> to vector<16x128xf32>
      %355 = arith.addf %353, %354 : vector<16x128xf32>
      %c0_144 = arith.constant 0 : index
      %c0_145 = arith.constant 0 : index
      %356 = vector.load %arg9[%c0_144, %c0_145] : memref<16x128xf32, #tpu.memory_space<vmem>>, vector<16x128xf32>
      tpu.vector_store %arg9[%c0_144, %c0_145], %355 {strides = array<i32>} : memref<16x128xf32, #tpu.memory_space<vmem>>, vector<16x128xf32>,
    } else {
    }
    return
  }
  func.func @transform_0(%arg0: i32, %arg1: i32) -> (i32, i32) {
    %c0_i32 = arith.constant 0 : i32
    %c0_i32_0 = arith.constant 0 : i32
    return %arg0, %c0_i32 : i32, i32
  }
  func.func @transform_1(%arg0: i32, %arg1: i32) -> (i32, i32) {
    %c0_i32 = arith.constant 0 : i32
    %c0_i32_0 = arith.constant 0 : i32
    return %arg0, %c0_i32 : i32, i32
  }
  func.func @transform_2(%arg0: i32, %arg1: i32) -> (i32, i32, i32) {
    %c0_i32 = arith.constant 0 : i32
    %c0_i32_0 = arith.constant 0 : i32
    %c0_i32_1 = arith.constant 0 : i32
    return %arg1, %c0_i32, %c0_i32_0 : i32, i32, i32
  }
  func.func @transform_3(%arg0: i32, %arg1: i32) -> (i32, i32, i32) {
    %c0_i32 = arith.constant 0 : i32
    %c0_i32_0 = arith.constant 0 : i32
    %c0_i32_1 = arith.constant 0 : i32
    return %arg1, %c0_i32, %c0_i32_0 : i32, i32, i32
  }
  func.func @transform_4(%arg0: i32, %arg1: i32) -> (i32, i32, i32) {
    %c0_i32 = arith.constant 0 : i32
    %c0_i32_0 = arith.constant 0 : i32
    %c0_i32_1 = arith.constant 0 : i32
    return %arg1, %c0_i32, %c0_i32_0 : i32, i32, i32
  }
  func.func @transform_5(%arg0: i32, %arg1: i32) -> (i32, i32, i32) {
    %c0_i32 = arith.constant 0 : i32
    %c0_i32_0 = arith.constant 0 : i32
    %c0_i32_1 = arith.constant 0 : i32
    return %arg1, %c0_i32, %c0_i32_0 : i32, i32, i32
  }
  func.func @transform_6(%arg0: i32, %arg1: i32) -> (i32, i32, i32) {
    %c0_i32 = arith.constant 0 : i32
    %c0_i32_0 = arith.constant 0 : i32
    %c0_i32_1 = arith.constant 0 : i32
    return %arg1, %c0_i32, %c0_i32_0 : i32, i32, i32
  }
  func.func @transform_7(%arg0: i32, %arg1: i32) -> (i32, i32) {
    %c0_i32 = arith.constant 0 : i32
    %c0_i32_0 = arith.constant 0 : i32
    return %arg0, %c0_i32 : i32, i32
  }
}

</mosaic_0001>

<llo_original>
// kernel: tpu_custom_call.1
$region0: #{tpu_custom_call.1}
  #allocation0 [shape = 'u32[]', space=smem, size = 0x4, offset = 0x4, fixed_abs, tag = 'smem constant byte address 0x4 - core index']
  #allocation1 [shape = 'u32[72,128]{1,0:T(1,128)}', space=vmem, size = 0x9000, scoped, tag = 'internal scratch']
  #allocation2 [shape = 'f32[16,128]{1,0:T(8,128)}', space=vmem, size = 0x2000, scoped, tag = 'scratch operand']
  %s0 = inlined_call_operand.hbm [shape: f32[16,128], index: 0, kind: input, shape index: {}]
  %s1 = inlined_call_operand.hbm [shape: f32[32,128], index: 1, kind: input, shape index: {}]
  %s2 = inlined_call_operand.hbm [shape: f32[3,24,128], index: 2, kind: input, shape index: {}]
  %s3 = inlined_call_operand.hbm [shape: f32[3,256,128], index: 3, kind: input, shape index: {}]
  %s4 = inlined_call_operand.hbm [shape: f32[3,32,128], index: 4, kind: input, shape index: {}]
  %s5 = inlined_call_operand.vmem [shape: f32[3,1,128], index: 5, kind: input, shape index: {}]
  %s6 = inlined_call_operand.hbm [shape: f32[3,32,128], index: 6, kind: input, shape index: {}]
  %s7 = inlined_call_operand.hbm [shape: f32[16,128], index: 7, kind: output, shape index: {}]
  %s8 = sld [smem:[#allocation0]]
  $region93: #{tpu_custom_call.1} parent=0
    _
  %s10 = ssub.s32 1, %s8
  %s11 = scalar_select 0, %s10, %s8
  $region1: #{tpu_custom_call.1} parent=0
    #allocation3 [shape = 'u8[8192]{0}', space=vmem, size = 0x2000, scoped, tag = 'input window, operand 0, single buffered']
    #allocation4 [shape = 's32[2]{0}', space=sflag, size = 0x8, scoped, tag = 'scoped memory for tpu_custom_call.1']
    #allocation5 [shape = 's32[2]{0}', space=sflag, size = 0x8, scoped, tag = 'scoped memory for tpu_custom_call.1']
    #allocation6 [shape = 'u8[16384]{0}', space=vmem, size = 0x4000, scoped, tag = 'input window, operand 1, single buffered']
    #allocation7 [shape = 's32[1]{0}', space=sflag, size = 0x4, scoped, tag = 'scoped memory for tpu_custom_call.1']
    #allocation8 [shape = 'u8[24576]{0}', space=vmem, size = 0x6000, scoped, tag = 'input window, operand 2']
    #allocation9 [shape = 'u8[262144]{0}', space=vmem, size = 0x40000, scoped, tag = 'input window, operand 3']
    #allocation10 [shape = 'u8[32768]{0}', space=vmem, size = 0x8000, scoped, tag = 'input window, operand 4']
    #allocation11 [shape = 'u8[32768]{0}', space=vmem, size = 0x8000, scoped, tag = 'input window, operand 6']
    #allocation12 [shape = 'u8[8192]{0}', space=vmem, size = 0x2000, scoped, tag = 'output window, operand 0, single buffered']
    %12 = vsyncpa [#allocation4], 0
    %13 = vsyncpa [#allocation7], 0
    %14 = vsyncpa [#allocation5], 0
    loop: start=0, step=1, limit=5
    $region2: #{tpu_custom_call.1} parent=1 // loop_pre_header
      _
    $region3: #{tpu_custom_call.1} parent=1 // loop_header
      %s16 = sphi 0, %s20
      %p17 = scmp.ge.s32.totalorder %s16, 5
      %s23 = sphi 0, %s35
      %s24 = sphi 0, %s31
      %s25 = sphi 0, %s23
      %s26 = sphi 0, %s24
      %s27 = sphi 0, %s25
      %s28 = sphi 0, %s26
      %s38 = sphi 0, %s40
      %s41 = sphi 0, %s38
      %s42 = sphi 0, %s41
      %s58 = sphi 0, %s42
      %s64 = sphi 0, %s66
      %s67 = sphi 0, %s64
      %s68 = sphi 0, %s67
      %s84 = sphi 0, %s68
      %s90 = sphi 0, %s92
      %s93 = sphi 0, %s90
      %s94 = sphi 0, %s93
      %s110 = sphi 0, %s94
      %s116 = sphi 0, %s118
      %s119 = sphi 0, %s116
      %s120 = sphi 0, %s119
      %s136 = sphi 0, %s120
      %s142 = sphi 0, %s144
      %s145 = sphi 0, %s142
      %s146 = sphi 0, %s145
      %s162 = sphi 0, %s146
      %s168 = sphi 0, %s170
      %s171 = sphi 0, %s168
      %s172 = sphi 0, %s171
      %s188 = sphi 0, %s172
      %s194 = sphi 0, %s196
      %s197 = sphi 0, %s194
      %s198 = sphi 0, %s197
      %s214 = sphi 0, %s198
      %s220 = sphi 0, %s222
      %s223 = sphi 0, %s220
      %s224 = sphi 0, %s223
      %s240 = sphi 0, %s224
    $region4: #{tpu_custom_call.1} parent=1 // loop_header_branch
      %19 = sbr.rel (%p17) target = $region8
    $region5: #{tpu_custom_call.1} parent=1 // loop_body
      %s21 = ssub.s32 %s16, 1
      %s22 = ssub.s32 %s16, 2
      %s29 = sadd.s32 1, %s24
      %p30 = scmp.ge.s32.totalorder %s29, 3
      %s31 = scalar_select %p30, 0, %s29
      %s32 = sadd.s32 1, %s23
      %s33 = scalar_select %p30, %s32, %s23
      %p34 = scmp.ge.s32.totalorder %s33, 1
      %s35 = scalar_select %p34, 0, %s33
      %s36 = ssub.s32 %s23, %s35
      %p37 = scmp.eq.s32.totalorder %s36, 0
      %s39 = sadd.s32 %s38, 1
      %s40 = scalar_select %p37, %s38, %s39
      %p43 = pneg %p37
      %p44 = scmp.eq.s32.totalorder %s16, 2
      %p45 = por %p43, %p44
      %p46 = scmp.ne.s32.totalorder %s38, %s41
      %p47 = scmp.eq.s32.totalorder %s16, 0
      %p48 = por %p46, %p47
      %p49 = scmp.ne.s32.totalorder %s38, %s41
      %p50 = scmp.eq.s32.totalorder %s21, 2
      %p51 = por %p49, %p50
      %p52 = scmp.ne.s32.totalorder %s41, %s42
      %p53 = scmp.eq.s32.totalorder %s21, 0
      %p54 = por %p52, %p53
      %p55 = scmp.ne.s32.totalorder %s41, %s42
      %p56 = scmp.eq.s32.totalorder %s22, 2
      %p57 = por %p55, %p56
      %p59 = scmp.ne.s32.totalorder %s42, %s58
      %p60 = scmp.eq.s32.totalorder %s22, 0
      %p61 = por %p59, %p60
      %s62 = ssub.s32 %s23, %s35
      %p63 = scmp.eq.s32.totalorder %s62, 0
      %s65 = sadd.s32 %s64, 1
      %s66 = scalar_select %p63, %s64, %s65
      %p69 = pneg %p63
      %p70 = scmp.eq.s32.totalorder %s16, 2
      %p71 = por %p69, %p70
      %p72 = scmp.ne.s32.totalorder %s64, %s67
      %p73 = scmp.eq.s32.totalorder %s16, 0
      %p74 = por %p72, %p73
      %p75 = scmp.ne.s32.totalorder %s64, %s67
      %p76 = scmp.eq.s32.totalorder %s21, 2
      %p77 = por %p75, %p76
      %p78 = scmp.ne.s32.totalorder %s67, %s68
      %p79 = scmp.eq.s32.totalorder %s21, 0
      %p80 = por %p78, %p79
      %p81 = scmp.ne.s32.totalorder %s67, %s68
      %p82 = scmp.eq.s32.totalorder %s22, 2
      %p83 = por %p81, %p82
      %p85 = scmp.ne.s32.totalorder %s68, %s84
      %p86 = scmp.eq.s32.totalorder %s22, 0
      %p87 = por %p85, %p86
      %s88 = ssub.s32 %s24, %s31
      %p89 = scmp.eq.s32.totalorder %s88, 0
      %s91 = sadd.s32 %s90, 1
      %s92 = scalar_select %p89, %s90, %s91
      %p95 = pneg %p89
      %p96 = scmp.eq.s32.totalorder %s16, 2
      %p97 = por %p95, %p96
      %p98 = scmp.ne.s32.totalorder %s90, %s93
      %p99 = scmp.eq.s32.totalorder %s16, 0
      %p100 = por %p98, %p99
      %p101 = scmp.ne.s32.totalorder %s90, %s93
      %p102 = scmp.eq.s32.totalorder %s21, 2
      %p103 = por %p101, %p102
      %p104 = scmp.ne.s32.totalorder %s93, %s94
      %p105 = scmp.eq.s32.totalorder %s21, 0
      %p106 = por %p104, %p105
      %p107 = scmp.ne.s32.totalorder %s93, %s94
      %p108 = scmp.eq.s32.totalorder %s22, 2
      %p109 = por %p107, %p108
      %p111 = scmp.ne.s32.totalorder %s94, %s110
      %p112 = scmp.eq.s32.totalorder %s22, 0
      %p113 = por %p111, %p112
      %s114 = ssub.s32 %s24, %s31
      %p115 = scmp.eq.s32.totalorder %s114, 0
      %s117 = sadd.s32 %s116, 1
      %s118 = scalar_select %p115, %s116, %s117
      %p121 = pneg %p115
      %p122 = scmp.eq.s32.totalorder %s16, 2
      %p123 = por %p121, %p122
      %p124 = scmp.ne.s32.totalorder %s116, %s119
      %p125 = scmp.eq.s32.totalorder %s16, 0
      %p126 = por %p124, %p125
      %p127 = scmp.ne.s32.totalorder %s116, %s119
      %p128 = scmp.eq.s32.totalorder %s21, 2
      %p129 = por %p127, %p128
      %p130 = scmp.ne.s32.totalorder %s119, %s120
      %p131 = scmp.eq.s32.totalorder %s21, 0
      %p132 = por %p130, %p131
      %p133 = scmp.ne.s32.totalorder %s119, %s120
      %p134 = scmp.eq.s32.totalorder %s22, 2
      %p135 = por %p133, %p134
      %p137 = scmp.ne.s32.totalorder %s120, %s136
      %p138 = scmp.eq.s32.totalorder %s22, 0
      %p139 = por %p137, %p138
      %s140 = ssub.s32 %s24, %s31
      %p141 = scmp.eq.s32.totalorder %s140, 0
      %s143 = sadd.s32 %s142, 1
      %s144 = scalar_select %p141, %s142, %s143
      %p147 = pneg %p141
      %p148 = scmp.eq.s32.totalorder %s16, 2
      %p149 = por %p147, %p148
      %p150 = scmp.ne.s32.totalorder %s142, %s145
      %p151 = scmp.eq.s32.totalorder %s16, 0
      %p152 = por %p150, %p151
      %p153 = scmp.ne.s32.totalorder %s142, %s145
      %p154 = scmp.eq.s32.totalorder %s21, 2
      %p155 = por %p153, %p154
      %p156 = scmp.ne.s32.totalorder %s145, %s146
      %p157 = scmp.eq.s32.totalorder %s21, 0
      %p158 = por %p156, %p157
      %p159 = scmp.ne.s32.totalorder %s145, %s146
      %p160 = scmp.eq.s32.totalorder %s22, 2
      %p161 = por %p159, %p160
      %p163 = scmp.ne.s32.totalorder %s146, %s162
      %p164 = scmp.eq.s32.totalorder %s22, 0
      %p165 = por %p163, %p164
      %s166 = ssub.s32 %s24, %s31
      %p167 = scmp.eq.s32.totalorder %s166, 0
      %s169 = sadd.s32 %s168, 1
      %s170 = scalar_select %p167, %s168, %s169
      %p173 = pneg %p167
      %p174 = scmp.eq.s32.totalorder %s16, 2
      %p175 = por %p173, %p174
      %p176 = scmp.ne.s32.totalorder %s168, %s171
      %p177 = scmp.eq.s32.totalorder %s16, 0
      %p178 = por %p176, %p177
      %p179 = scmp.ne.s32.totalorder %s168, %s171
      %p180 = scmp.eq.s32.totalorder %s21, 2
      %p181 = por %p179, %p180
      %p182 = scmp.ne.s32.totalorder %s171, %s172
      %p183 = scmp.eq.s32.totalorder %s21, 0
      %p184 = por %p182, %p183
      %p185 = scmp.ne.s32.totalorder %s171, %s172
      %p186 = scmp.eq.s32.totalorder %s22, 2
      %p187 = por %p185, %p186
      %p189 = scmp.ne.s32.totalorder %s172, %s188
      %p190 = scmp.eq.s32.totalorder %s22, 0
      %p191 = por %p189, %p190
      %s192 = ssub.s32 %s24, %s31
      %p193 = scmp.eq.s32.totalorder %s192, 0
      %s195 = sadd.s32 %s194, 1
      %s196 = scalar_select %p193, %s194, %s195
      %p199 = pneg %p193
      %p200 = scmp.eq.s32.totalorder %s16, 2
      %p201 = por %p199, %p200
      %p202 = scmp.ne.s32.totalorder %s194, %s197
      %p203 = scmp.eq.s32.totalorder %s16, 0
      %p204 = por %p202, %p203
      %p205 = scmp.ne.s32.totalorder %s194, %s197
      %p206 = scmp.eq.s32.totalorder %s21, 2
      %p207 = por %p205, %p206
      %p208 = scmp.ne.s32.totalorder %s197, %s198
      %p209 = scmp.eq.s32.totalorder %s21, 0
      %p210 = por %p208, %p209
      %p211 = scmp.ne.s32.totalorder %s197, %s198
      %p212 = scmp.eq.s32.totalorder %s22, 2
      %p213 = por %p211, %p212
      %p215 = scmp.ne.s32.totalorder %s198, %s214
      %p216 = scmp.eq.s32.totalorder %s22, 0
      %p217 = por %p215, %p216
      %s218 = ssub.s32 %s23, %s35
      %p219 = scmp.eq.s32.totalorder %s218, 0
      %s221 = sadd.s32 %s220, 1
      %s222 = scalar_select %p219, %s220, %s221
      %p225 = pneg %p219
      %p226 = scmp.eq.s32.totalorder %s16, 2
      %p227 = por %p225, %p226
      %p228 = scmp.ne.s32.totalorder %s220, %s223
      %p229 = scmp.eq.s32.totalorder %s16, 0
      %p230 = por %p228, %p229
      %p231 = scmp.ne.s32.totalorder %s220, %s223
      %p232 = scmp.eq.s32.totalorder %s21, 2
      %p233 = por %p231, %p232
      %p234 = scmp.ne.s32.totalorder %s223, %s224
      %p235 = scmp.eq.s32.totalorder %s21, 0
      %p236 = por %p234, %p235
      %p237 = scmp.ne.s32.totalorder %s223, %s224
      %p238 = scmp.eq.s32.totalorder %s22, 2
      %p239 = por %p237, %p238
      %p241 = scmp.ne.s32.totalorder %s224, %s240
      %p242 = scmp.eq.s32.totalorder %s22, 0
      %p243 = por %p241, %p242
      %p244 = scmp.le.s32.totalorder 1, %s16
      %p245 = scmp.lt.s32.totalorder %s16, 4
      %p246 = pnand %p244, %p245
      %p247 = pneg %p246
      // Predicated region
      $region9: #{tpu_custom_call.1} parent=5 // pred_check
        _
      $region10: #{tpu_custom_call.1} parent=5 // pred_check_branch
        %249 = sbr.rel (%p246) target = $region12
      $region11: #{tpu_custom_call.1} parent=5 // pred_region
        %s250 = ssub.s32 %s16, 1
        // Predicated region
        $region13: #{tpu_custom_call.1} parent=11 // pred_check
          %p251 = pneg %p54
        $region14: #{tpu_custom_call.1} parent=11 // pred_check_branch
          %253 = sbr.rel (%p251) target = $region16
        $region15: #{tpu_custom_call.1} parent=11 // pred_region
          %s254 = smul.u32 2, %s25
          %256 = vsyncadd [#allocation4], 0
          %s257 = smul.addr %s254, 8
          %s258 = scalar_lea.hbm %s0, %s257
          %s259 = sshll.u32 %s258, 4
          %s260 = int_to_ptr.hbm [resolvable:$true] %s259
          %s261 = sshll.u32 [#allocation3], 4
          %s262 = int_to_ptr.vmem [resolvable:$true] %s261
          %267 = dma.hbm_to_vmem [thread:$0]  %s260, 256, %s262, [#allocation4], 128, 128, 8
        $region16: #{tpu_custom_call.1} parent=11 // pred_fallthru
          _
        // Predicated region
        $region17: #{tpu_custom_call.1} parent=11 // pred_check
          %p268 = pneg %p80
        $region18: #{tpu_custom_call.1} parent=11 // pred_check_branch
          %270 = sbr.rel (%p268) target = $region20
        $region19: #{tpu_custom_call.1} parent=11 // pred_region
          %s271 = smul.u32 4, %s25
          %273 = vsyncadd [#allocation7], 0
          %s274 = smul.addr %s271, 8
          %s275 = scalar_lea.hbm %s1, %s274
          %s276 = sshll.u32 %s275, 4
          %s277 = int_to_ptr.hbm [resolvable:$true] %s276
          %s278 = sshll.u32 [#allocation6], 4
          %s279 = int_to_ptr.vmem [resolvable:$true] %s278
          %284 = dma.hbm_to_vmem [thread:$0]  %s277, 512, %s279, [#allocation7], 128, 128, 8
        $region20: #{tpu_custom_call.1} parent=11 // pred_fallthru
          _
      $region12: #{tpu_custom_call.1} parent=5 // pred_fallthru
        _
      %p285 = scmp.lt.s32.totalorder %s16, 3
      // Predicated region
      $region21: #{tpu_custom_call.1} parent=5 // pred_check
        %p286 = pneg %p285
      $region22: #{tpu_custom_call.1} parent=5 // pred_check_branch
        %288 = sbr.rel (%p286) target = $region24
      $region23: #{tpu_custom_call.1} parent=5 // pred_region
        // Predicated region
        $region25: #{tpu_custom_call.1} parent=23 // pred_check
          %p289 = pneg %p100
        $region26: #{tpu_custom_call.1} parent=23 // pred_check_branch
          %291 = sbr.rel (%p289) target = $region28
        $region27: #{tpu_custom_call.1} parent=23 // pred_region
          %s292 = sand.u32 %s16, 1
          %s293 = scalar_lea.sflag [#allocation4], %s292
          %s294 = sand.u32 %s90, 1
          %s295 = smul.addr %s294, 24
          %s296 = scalar_lea.vmem [#allocation8], %s295
          %298 = vsyncadd %s293, 0
          %s299 = smul.addr %s24, 3
          %s300 = smul.addr %s299, 8
          %s301 = scalar_lea.hbm %s2, %s300
          %s302 = sshll.u32 %s301, 4
          %s303 = int_to_ptr.hbm [resolvable:$true] %s302
          %s304 = sshll.u32 %s296, 4
          %s305 = int_to_ptr.vmem [resolvable:$true] %s304
          %310 = dma.hbm_to_vmem [thread:$0]  %s303, 384, %s305, %s293, 128, 128, 8
        $region28: #{tpu_custom_call.1} parent=23 // pred_fallthru
          _
        // Predicated region
        $region29: #{tpu_custom_call.1} parent=23 // pred_check
          %p311 = pneg %p126
        $region30: #{tpu_custom_call.1} parent=23 // pred_check_branch
          %313 = sbr.rel (%p311) target = $region32
        $region31: #{tpu_custom_call.1} parent=23 // pred_region
          %s314 = sand.u32 %s16, 1
          %s315 = scalar_lea.sflag [#allocation4], %s314
          %s316 = sand.u32 %s116, 1
          %s317 = smul.addr %s316, 256
          %s318 = scalar_lea.vmem [#allocation9], %s317
          %320 = vsyncadd %s315, 0
          %s321 = smul.addr %s24, 32
          %s322 = smul.addr %s321, 8
          %s323 = scalar_lea.hbm %s3, %s322
          %s324 = sshll.u32 %s323, 4
          %s325 = int_to_ptr.hbm [resolvable:$true] %s324
          %s326 = sshll.u32 %s318, 4
          %s327 = int_to_ptr.vmem [resolvable:$true] %s326
          %332 = dma.hbm_to_vmem [thread:$0]  %s325, 4096, %s327, %s315, 128, 128, 8
        $region32: #{tpu_custom_call.1} parent=23 // pred_fallthru
          _
        // Predicated region
        $region33: #{tpu_custom_call.1} parent=23 // pred_check
          %p333 = pneg %p152
        $region34: #{tpu_custom_call.1} parent=23 // pred_check_branch
          %335 = sbr.rel (%p333) target = $region36
        $region35: #{tpu_custom_call.1} parent=23 // pred_region
          %s336 = sand.u32 %s16, 1
          %s337 = scalar_lea.sflag [#allocation4], %s336
          %s338 = sand.u32 %s142, 1
          %s339 = smul.addr %s338, 32
          %s340 = scalar_lea.vmem [#allocation10], %s339
          %342 = vsyncadd %s337, 0
          %s343 = smul.addr %s24, 4
          %s344 = smul.addr %s343, 8
          %s345 = scalar_lea.hbm %s4, %s344
          %s346 = sshll.u32 %s345, 4
          %s347 = int_to_ptr.hbm [resolvable:$true] %s346
          %s348 = sshll.u32 %s340, 4
          %s349 = int_to_ptr.vmem [resolvable:$true] %s348
          %354 = dma.hbm_to_vmem [thread:$0]  %s347, 512, %s349, %s337, 128, 128, 8
        $region36: #{tpu_custom_call.1} parent=23 // pred_fallthru
          _
        // Predicated region
        $region37: #{tpu_custom_call.1} parent=23 // pred_check
          %p355 = pneg %p178
        $region38: #{tpu_custom_call.1} parent=23 // pred_check_branch
          %357 = sbr.rel (%p355) target = $region40
        $region39: #{tpu_custom_call.1} parent=23 // pred_region
          %p358 = scmp.lt.s32.totalorder %s24, 2
          %s359 = scalar_select %p358, %s24, 2
          %s360 = scalar_lea.vmem %s5, %s359
        $region40: #{tpu_custom_call.1} parent=23 // pred_fallthru
          _
        // Predicated region
        $region41: #{tpu_custom_call.1} parent=23 // pred_check
          %p361 = pneg %p204
        $region42: #{tpu_custom_call.1} parent=23 // pred_check_branch
          %363 = sbr.rel (%p361) target = $region44
        $region43: #{tpu_custom_call.1} parent=23 // pred_region
          %s364 = sand.u32 %s16, 1
          %s365 = scalar_lea.sflag [#allocation4], %s364
          %s366 = sand.u32 %s194, 1
          %s367 = smul.addr %s366, 32
          %s368 = scalar_lea.vmem [#allocation11], %s367
          %370 = vsyncadd %s365, 0
          %s371 = smul.addr %s24, 4
          %s372 = smul.addr %s371, 8
          %s373 = scalar_lea.hbm %s6, %s372
          %s374 = sshll.u32 %s373, 4
          %s375 = int_to_ptr.hbm [resolvable:$true] %s374
          %s376 = sshll.u32 %s368, 4
          %s377 = int_to_ptr.vmem [resolvable:$true] %s376
          %382 = dma.hbm_to_vmem [thread:$0]  %s375, 512, %s377, %s365, 128, 128, 8
        $region44: #{tpu_custom_call.1} parent=23 // pred_fallthru
          _
      $region24: #{tpu_custom_call.1} parent=5 // pred_fallthru
        _
      %p383 = scmp.le.s32.totalorder 1, %s16
      %p384 = scmp.lt.s32.totalorder %s16, 4
      %p385 = pnand %p383, %p384
      %p386 = pneg %p385
      // Predicated region
      $region45: #{tpu_custom_call.1} parent=5 // pred_check
        _
      $region46: #{tpu_custom_call.1} parent=5 // pred_check_branch
        %388 = sbr.rel (%p385) target = $region48
      $region47: #{tpu_custom_call.1} parent=5 // pred_region
        %s389 = ssub.s32 %s16, 1
        // Predicated region
        $region49: #{tpu_custom_call.1} parent=47 // pred_check
          %p390 = pneg %p54
        $region50: #{tpu_custom_call.1} parent=47 // pred_check_branch
          %392 = sbr.rel (%p390) target = $region52
        $region51: #{tpu_custom_call.1} parent=47 // pred_region
          %394 = dma.done [#allocation4], 256
        $region52: #{tpu_custom_call.1} parent=47 // pred_fallthru
          _
        // Predicated region
        $region53: #{tpu_custom_call.1} parent=47 // pred_check
          %p395 = pneg %p80
        $region54: #{tpu_custom_call.1} parent=47 // pred_check_branch
          %397 = sbr.rel (%p395) target = $region56
        $region55: #{tpu_custom_call.1} parent=47 // pred_region
          %399 = dma.done [#allocation7], 512
        $region56: #{tpu_custom_call.1} parent=47 // pred_fallthru
          _
        %s400 = sand.u32 %s21, 1
        %s401 = scalar_lea.sflag [#allocation4], %s400
        %s402 = sand.u32 %s93, 1
        %s403 = smul.addr %s402, 24
        %s404 = scalar_lea.vmem [#allocation8], %s403
        // Predicated region
        $region57: #{tpu_custom_call.1} parent=47 // pred_check
          %p405 = pneg %p106
        $region58: #{tpu_custom_call.1} parent=47 // pred_check_branch
          %407 = sbr.rel (%p405) target = $region60
        $region59: #{tpu_custom_call.1} parent=47 // pred_region
          %409 = dma.done %s401, 384
        $region60: #{tpu_custom_call.1} parent=47 // pred_fallthru
          _
        %s410 = sand.u32 %s21, 1
        %s411 = scalar_lea.sflag [#allocation4], %s410
        %s412 = sand.u32 %s119, 1
        %s413 = smul.addr %s412, 256
        %s414 = scalar_lea.vmem [#allocation9], %s413
        // Predicated region
        $region61: #{tpu_custom_call.1} parent=47 // pred_check
          %p415 = pneg %p132
        $region62: #{tpu_custom_call.1} parent=47 // pred_check_branch
          %417 = sbr.rel (%p415) target = $region64
        $region63: #{tpu_custom_call.1} parent=47 // pred_region
          %419 = dma.done %s411, 4096
        $region64: #{tpu_custom_call.1} parent=47 // pred_fallthru
          _
        %s420 = sand.u32 %s21, 1
        %s421 = scalar_lea.sflag [#allocation4], %s420
        %s422 = sand.u32 %s145, 1
        %s423 = smul.addr %s422, 32
        %s424 = scalar_lea.vmem [#allocation10], %s423
        // Predicated region
        $region65: #{tpu_custom_call.1} parent=47 // pred_check
          %p425 = pneg %p158
        $region66: #{tpu_custom_call.1} parent=47 // pred_check_branch
          %427 = sbr.rel (%p425) target = $region68
        $region67: #{tpu_custom_call.1} parent=47 // pred_region
          %429 = dma.done %s421, 512
        $region68: #{tpu_custom_call.1} parent=47 // pred_fallthru
          _
        %s430 = sand.u32 %s21, 1
        %s431 = scalar_lea.sflag [#allocation4], %s430
        %s432 = sand.u32 %s197, 1
        %s433 = smul.addr %s432, 32
        %s434 = scalar_lea.vmem [#allocation11], %s433
        // Predicated region
        $region69: #{tpu_custom_call.1} parent=47 // pred_check
          %p435 = pneg %p210
        $region70: #{tpu_custom_call.1} parent=47 // pred_check_branch
          %437 = sbr.rel (%p435) target = $region72
        $region71: #{tpu_custom_call.1} parent=47 // pred_region
          %439 = dma.done %s431, 512
        $region72: #{tpu_custom_call.1} parent=47 // pred_fallthru
          _
        %p440 = pneg %p54
        %p441 = pneg %p51
        %p442 = pneg %p80
        %p443 = pneg %p77
        %s444 = sand.u32 %s21, 1
        %s445 = scalar_lea.sflag [#allocation4], %s444
        %s446 = sand.u32 %s93, 1
        %s447 = smul.addr %s446, 24
        %s448 = scalar_lea.vmem [#allocation8], %s447
        %p449 = pneg %p106
        %p450 = pneg %p103
        %s451 = sand.u32 %s21, 1
        %s452 = scalar_lea.sflag [#allocation4], %s451
        %s453 = sand.u32 %s119, 1
        %s454 = smul.addr %s453, 256
        %s455 = scalar_lea.vmem [#allocation9], %s454
        %p456 = pneg %p132
        %p457 = pneg %p129
        %s458 = sand.u32 %s21, 1
        %s459 = scalar_lea.sflag [#allocation4], %s458
        %s460 = sand.u32 %s145, 1
        %s461 = smul.addr %s460, 32
        %s462 = scalar_lea.vmem [#allocation10], %s461
        %p463 = pneg %p158
        %p464 = pneg %p155
        %p465 = scmp.lt.s32.totalorder %s26, 2
        %s466 = scalar_select %p465, %s26, 2
        %s467 = scalar_lea.vmem %s5, %s466
        %p468 = pneg %p184
        %p469 = pneg %p181
        %s470 = sand.u32 %s21, 1
        %s471 = scalar_lea.sflag [#allocation4], %s470
        %s472 = sand.u32 %s197, 1
        %s473 = smul.addr %s472, 32
        %s474 = scalar_lea.vmem [#allocation11], %s473
        %p475 = pneg %p210
        %p476 = pneg %p207
        %p477 = pneg %p236
        %p478 = pneg %p233
        %s479 = smul.u32 2, %s25
        %s480 = smul.u32 4, %s25
        %p481 = scmp.lt.s32.totalorder %s26, 2
        %s482 = scalar_select %p481, %s26, 2
        %s483 = scalar_lea.vmem %s5, %s482
        %s484 = smul.u32 2, %s25
        %v485 = vlaneseq
        %v486 = vand.u32 %v485, 127
        %vm487 = vcmp.lt.s32.totalorder %v486, 32
        %v488 = vsel %vm487, 1, 0
        %v489 = vcvt.s32.f32 %v488
        %vm490 = vcmp.lt.s32.totalorder %v486, 10
        %v491 = vsel %vm490, 0.0, -1e+30
        %p492 = scmp.eq.s32.totalorder %s26, 0
        // Predicated region
        $region73: #{tpu_custom_call.1} parent=47 // pred_check
          %p493 = pneg %p492
        $region74: #{tpu_custom_call.1} parent=47 // pred_check_branch
          %495 = sbr.rel (%p493) target = $region76
        $region75: #{tpu_custom_call.1} parent=47 // pred_region
          %v496 = vld [vmem:[#allocation3] sm:$0xff]
          %v497 = vld [vmem:[#allocation3 + $0x8] sm:$0xff]
          %498 = vst [vmem:[#allocation2] sm:$0xff] %v496
          %499 = vst [vmem:[#allocation2 + $0x8] sm:$0xff] %v497
        $region76: #{tpu_custom_call.1} parent=47 // pred_fallthru
          _
        %v500 = vld [vmem:[#allocation2] sm:$0xff]
        %v501 = vld [vmem:[#allocation2 + $0x8] sm:$0xff]
        %v502 = vld [vmem:[#allocation6] sm:$0xff]
        %v503 = vld [vmem:[#allocation6 + $0x8] sm:$0xff]
        %v504 = vld [vmem:[#allocation6 + $0x10] sm:$0xff]
        %v505 = vld [vmem:[#allocation6 + $0x18] sm:$0xff]
        %v506 = vld [vmem:[%s404] sm:$0x1]
        %v507 = vld [vmem:[%s404 + $0x6] sm:$0x1]
        %508 = vadd.xlane.f32.xlu0 %v500
        %v509 = vpop.xlane.xlu0 %508
        %510 = vadd.xlane.f32.xlu0 %v501
        %v511 = vpop.xlane.xlu0 %510
        %v512 = vmul.f32 %v509, 0.03125
        %v513 = vmul.f32 %v511, 0.03125
        %v514 = vsub.f32 %v500, %v512
        %v515 = vsub.f32 %v501, %v513
        %v516 = vmul.f32 %v514, %v489
        %v517 = vmul.f32 %v515, %v489
        %v518 = vmul.f32 %v516, %v516
        %v519 = vmul.f32 %v517, %v517
        %520 = vadd.xlane.f32.xlu0 %v518
        %v521 = vpop.xlane.xlu0 %520
        %522 = vadd.xlane.f32.xlu0 %v519
        %v523 = vpop.xlane.xlu0 %522
        %v524 = vmul.f32 %v521, 0.03125
        %v525 = vmul.f32 %v523, 0.03125
        %v526 = vadd.f32 %v524, 1e-05
        %v527 = vadd.f32 %v525, 1e-05
        %v528 = vrsqrt.pop %v526
        %v529 = vmul.f32 %v528, %v526
        %v530 = vmul.f32 %v529, %v528
        %v531 = vmul.f32 0.5, %v530
        %v532 = vsub.f32 1.5, %v531
        %v533 = vmul.f32 %v528, %v532
        %vm534 = vweird.f32 %v526
        %vm535 = vweird.f32 %v528
        %vm536 = vmor %vm534, %vm535
        %v537 = vsel %vm536, %v528, %v533
        %v538 = vrsqrt.pop %v527
        %v539 = vmul.f32 %v538, %v527
        %v540 = vmul.f32 %v539, %v538
        %v541 = vmul.f32 0.5, %v540
        %v542 = vsub.f32 1.5, %v541
        %v543 = vmul.f32 %v538, %v542
        %vm544 = vweird.f32 %v527
        %vm545 = vweird.f32 %v538
        %vm546 = vmor %vm544, %vm545
        %v547 = vsel %vm546, %v538, %v543
        %v548 = vmul.f32 %v516, %v537
        %v549 = vmul.f32 %v517, %v547
        %v550 = vperm.slane %v506, 0
        %v551 = vmul.f32 %v548, %v550
        %v552 = vmul.f32 %v549, %v550
        %v553 = vperm.slane %v507, 0
        %v554 = vadd.f32 %v551, %v553
        %v555 = vadd.f32 %v552, %v553
        %v556 = vld [vmem:[%s414] sm:$0xff]
        %v557 = vld [vmem:[%s414 + $0x8] sm:$0xff]
        %v558 = vld [vmem:[%s414 + $0x10] sm:$0xff]
        %v559 = vld [vmem:[%s414 + $0x18] sm:$0xff]
        %v560 = vld [vmem:[%s404 + $0xc] sm:$0x1]
        %v561 = vperm.slane %v560, 0
        %vm562 = vcmask 261120
        %v564 = vsel %vm562, %v554, 0
        %v567 = vsel %vm562, %v555, 0
        %569 = vmatpush.msra.mxu0 0.0
        %570 = vmatpush.msra.mxu0 0.0
        %571 = vmatpush.msra.mxu0 0.0
        %572 = vmatpush.msra.mxu0 0.0
        %573 = vmatpush.msra.mxu0 0.0
        %574 = vmatpush.msra.mxu0 0.0
        %575 = vmatpush.msra.mxu0 0.0
        %576 = vmatpush.msra.mxu0 0.0
        %577 = vmatpush.msra.mxu0 0.0
        %578 = vmatpush.msra.mxu0 0.0
        %579 = vmatpush.msra.mxu0 0.0
        %580 = vmatpush.msra.mxu0 0.0
        %581 = vmatpush.msra.mxu0 %v559
        %582 = vmatpush.msra.mxu0 %v558
        %583 = vmatpush.msra.mxu0 %v557
        %584 = vmatpush.msra.mxu0 %v556
        %585 = vmatmul.f32.gmra.mxu0 %v564
        %v586 = vpop.f32.mrf.mxu0
        %v587 = vadd.f32 %v561, %v586
        %588 = vmatmul.f32.gmra.mxu0 %v567
        %v589 = vpop.f32.mrf.mxu0
        %v590 = vadd.f32 %v561, %v589
        %591 = vdwg.mxu0
        %v592 = vld [vmem:[%s414 + $0x20] sm:$0xff]
        %v593 = vld [vmem:[%s414 + $0x28] sm:$0xff]
        %v594 = vld [vmem:[%s414 + $0x30] sm:$0xff]
        %v595 = vld [vmem:[%s414 + $0x38] sm:$0xff]
        %v596 = vld [vmem:[%s404 + $0xd] sm:$0x1]
        %v597 = vperm.slane %v596, 0
        %598 = vmatpush.msra.mxu0 0.0
        %599 = vmatpush.msra.mxu0 0.0
        %600 = vmatpush.msra.mxu0 0.0
        %601 = vmatpush.msra.mxu0 0.0
        %602 = vmatpush.msra.mxu0 0.0
        %603 = vmatpush.msra.mxu0 0.0
        %604 = vmatpush.msra.mxu0 0.0
        %605 = vmatpush.msra.mxu0 0.0
        %606 = vmatpush.msra.mxu0 0.0
        %607 = vmatpush.msra.mxu0 0.0
        %608 = vmatpush.msra.mxu0 0.0
        %609 = vmatpush.msra.mxu0 0.0
        %610 = vmatpush.msra.mxu0 %v595
        %611 = vmatpush.msra.mxu0 %v594
        %612 = vmatpush.msra.mxu0 %v593
        %613 = vmatpush.msra.mxu0 %v592
        %614 = vmatmul.f32.gmra.mxu0 %v564
        %v615 = vpop.f32.mrf.mxu0
        %v616 = vadd.f32 %v597, %v615
        %617 = vmatmul.f32.gmra.mxu0 %v567
        %v618 = vpop.f32.mrf.mxu0
        %v619 = vadd.f32 %v597, %v618
        %620 = vdwg.mxu0
        %v621 = vld [vmem:[%s414 + $0x40] sm:$0xff]
        %v622 = vld [vmem:[%s414 + $0x48] sm:$0xff]
        %v623 = vld [vmem:[%s414 + $0x50] sm:$0xff]
        %v624 = vld [vmem:[%s414 + $0x58] sm:$0xff]
        %v625 = vld [vmem:[%s404 + $0xe] sm:$0x1]
        %v626 = vperm.slane %v625, 0
        %627 = vmatpush.msra.mxu0 0.0
        %628 = vmatpush.msra.mxu0 0.0
        %629 = vmatpush.msra.mxu0 0.0
        %630 = vmatpush.msra.mxu0 0.0
        %631 = vmatpush.msra.mxu0 0.0
        %632 = vmatpush.msra.mxu0 0.0
        %633 = vmatpush.msra.mxu0 0.0
        %634 = vmatpush.msra.mxu0 0.0
        %635 = vmatpush.msra.mxu0 0.0
        %636 = vmatpush.msra.mxu0 0.0
        %637 = vmatpush.msra.mxu0 0.0
        %638 = vmatpush.msra.mxu0 0.0
        %639 = vmatpush.msra.mxu0 %v624
        %640 = vmatpush.msra.mxu0 %v623
        %641 = vmatpush.msra.mxu0 %v622
        %642 = vmatpush.msra.mxu0 %v621
        %643 = vmatmul.f32.gmra.mxu0 %v564
        %v644 = vpop.f32.mrf.mxu0
        %v645 = vadd.f32 %v626, %v644
        %646 = vmatmul.f32.gmra.mxu0 %v567
        %v647 = vpop.f32.mrf.mxu0
        %v648 = vadd.f32 %v626, %v647
        %649 = vdwg.mxu0
        %v651 = vsel %vm562, %v587, 0
        %v654 = vsel %vm562, %v616, 0
        %656 = vmatpush.xpose.msra.mxu0 0.0
        %657 = vmatpush.xpose.msra.mxu0 0.0
        %658 = vmatpush.xpose.msra.mxu0 0.0
        %659 = vmatpush.xpose.msra.mxu0 0.0
        %660 = vmatpush.xpose.msra.mxu0 0.0
        %661 = vmatpush.xpose.msra.mxu0 0.0
        %662 = vmatpush.xpose.msra.mxu0 0.0
        %663 = vmatpush.xpose.msra.mxu0 0.0
        %664 = vmatpush.xpose.msra.mxu0 0.0
        %665 = vmatpush.xpose.msra.mxu0 0.0
        %666 = vmatpush.xpose.msra.mxu0 0.0
        %667 = vmatpush.xpose.msra.mxu0 0.0
        %668 = vmatpush.xpose.msra.mxu0 0.0
        %669 = vmatpush.xpose.msra.mxu0 0.0
        %670 = vmatpush.xpose.msra.mxu0 0.0
        %671 = vmatpush.xpose.msra.mxu0 %v654
        %672 = vmatmul.f32.gmra.mxu0 %v651
        %v673 = vpop.f32.mrf.mxu0
        %v674 = vadd.f32 0.0, %v673
        %675 = vdwg.mxu0
        %vm676 = vcmask 64512
        %v677 = vsel %vm676, %v674, -inf
        %678 = vmax.xlane.f32.xlu0 %v677
        %v679 = vpop.xlane.xlu0 %678
        %v680 = vsub.f32 %v674, %v679
        %v681 = vmul.f32 %v680, 1.442695
        %v682 = vpow.pop %v681
        %v683 = vsel %vm676, %v682, 0.0
        %684 = vadd.xlane.f32.xlu0 %v683
        %v685 = vpop.xlane.xlu0 %684
        %v686 = vrcp.pop %v685
        %v687 = vmul.f32 %v685, %v686
        %v688 = vsub.f32 1.0, %v687
        %v689 = vmul.f32 %v686, %v688
        %v690 = vadd.f32 %v686, %v689
        %vm691 = vweird.f32 %v685
        %vm692 = vweird.f32 %v686
        %vm693 = vmor %vm691, %vm692
        %v694 = vsel %vm693, %v686, %v690
        %v695 = vand.u32 2147483647, %v685
        %vm696 = vcmp.eq.f32.partialorder %v695, 8.507059e+37
        %v697 = vand.u32 %v685, 2147483648
        %v698 = vor.u32 1.1754944e-38, %v697
        %v699 = vsel %vm696, %v698, %v694
        %v700 = vmul.f32 %v682, %v699
        %v702 = vsel %vm676, %v700, 0
        %704 = vmatpush.msra.mxu0 0.0
        %705 = vmatpush.msra.mxu0 0.0
        %706 = vmatpush.msra.mxu0 0.0
        %707 = vmatpush.msra.mxu0 0.0
        %708 = vmatpush.msra.mxu0 0.0
        %709 = vmatpush.msra.mxu0 0.0
        %710 = vmatpush.msra.mxu0 0.0
        %711 = vmatpush.msra.mxu0 0.0
        %712 = vmatpush.msra.mxu0 0.0
        %713 = vmatpush.msra.mxu0 0.0
        %714 = vmatpush.msra.mxu0 0.0
        %715 = vmatpush.msra.mxu0 0.0
        %716 = vmatpush.msra.mxu0 0.0
        %717 = vmatpush.msra.mxu0 0.0
        %718 = vmatpush.msra.mxu0 0.0
        %719 = vmatpush.msra.mxu0 %v645
        %720 = vmatmul.f32.gmra.mxu0 %v702
        %v721 = vpop.f32.mrf.mxu0
        %v722 = vadd.f32 0.0, %v721
        %723 = vdwg.mxu0
        %v725 = vsel %vm562, %v590, 0
        %v728 = vsel %vm562, %v619, 0
        %730 = vmatpush.xpose.msra.mxu0 0.0
        %731 = vmatpush.xpose.msra.mxu0 0.0
        %732 = vmatpush.xpose.msra.mxu0 0.0
        %733 = vmatpush.xpose.msra.mxu0 0.0
        %734 = vmatpush.xpose.msra.mxu0 0.0
        %735 = vmatpush.xpose.msra.mxu0 0.0
        %736 = vmatpush.xpose.msra.mxu0 0.0
        %737 = vmatpush.xpose.msra.mxu0 0.0
        %738 = vmatpush.xpose.msra.mxu0 0.0
        %739 = vmatpush.xpose.msra.mxu0 0.0
        %740 = vmatpush.xpose.msra.mxu0 0.0
        %741 = vmatpush.xpose.msra.mxu0 0.0
        %742 = vmatpush.xpose.msra.mxu0 0.0
        %743 = vmatpush.xpose.msra.mxu0 0.0
        %744 = vmatpush.xpose.msra.mxu0 0.0
        %745 = vmatpush.xpose.msra.mxu0 %v728
        %746 = vmatmul.f32.gmra.mxu0 %v725
        %v747 = vpop.f32.mrf.mxu0
        %v748 = vadd.f32 0.0, %v747
        %749 = vdwg.mxu0
        %v750 = vsel %vm676, %v748, -inf
        %751 = vmax.xlane.f32.xlu0 %v750
        %v752 = vpop.xlane.xlu0 %751
        %v753 = vsub.f32 %v748, %v752
        %v754 = vmul.f32 %v753, 1.442695
        %v755 = vpow.pop %v754
        %v756 = vsel %vm676, %v755, 0.0
        %757 = vadd.xlane.f32.xlu0 %v756
        %v758 = vpop.xlane.xlu0 %757
        %v759 = vrcp.pop %v758
        %v760 = vmul.f32 %v758, %v759
        %v761 = vsub.f32 1.0, %v760
        %v762 = vmul.f32 %v759, %v761
        %v763 = vadd.f32 %v759, %v762
        %vm764 = vweird.f32 %v758
        %vm765 = vweird.f32 %v759
        %vm766 = vmor %vm764, %vm765
        %v767 = vsel %vm766, %v759, %v763
        %v768 = vand.u32 2147483647, %v758
        %vm769 = vcmp.eq.f32.partialorder %v768, 8.507059e+37
        %v770 = vand.u32 %v758, 2147483648
        %v771 = vor.u32 1.1754944e-38, %v770
        %v772 = vsel %vm769, %v771, %v767
        %v773 = vmul.f32 %v755, %v772
        %v775 = vsel %vm676, %v773, 0
        %777 = vmatpush.msra.mxu0 0.0
        %778 = vmatpush.msra.mxu0 0.0
        %779 = vmatpush.msra.mxu0 0.0
        %780 = vmatpush.msra.mxu0 0.0
        %781 = vmatpush.msra.mxu0 0.0
        %782 = vmatpush.msra.mxu0 0.0
        %783 = vmatpush.msra.mxu0 0.0
        %784 = vmatpush.msra.mxu0 0.0
        %785 = vmatpush.msra.mxu0 0.0
        %786 = vmatpush.msra.mxu0 0.0
        %787 = vmatpush.msra.mxu0 0.0
        %788 = vmatpush.msra.mxu0 0.0
        %789 = vmatpush.msra.mxu0 0.0
        %790 = vmatpush.msra.mxu0 0.0
        %791 = vmatpush.msra.mxu0 0.0
        %792 = vmatpush.msra.mxu0 %v648
        %793 = vmatmul.f32.gmra.mxu0 %v775
        %v794 = vpop.f32.mrf.mxu0
        %v795 = vadd.f32 0.0, %v794
        %796 = vdwg.mxu0
        %v797 = vld [vmem:[%s404 + $0x1] sm:$0x1]
        %v798 = vld [vmem:[%s404 + $0x7] sm:$0x1]
        %799 = vadd.xlane.f32.xlu0 %v722
        %v800 = vpop.xlane.xlu0 %799
        %801 = vadd.xlane.f32.xlu0 %v795
        %v802 = vpop.xlane.xlu0 %801
        %v803 = vmul.f32 %v800, 0.03125
        %v804 = vmul.f32 %v802, 0.03125
        %v805 = vsub.f32 %v722, %v803
        %v806 = vsub.f32 %v795, %v804
        %v807 = vmul.f32 %v805, %v489
        %v808 = vmul.f32 %v806, %v489
        %v809 = vmul.f32 %v807, %v807
        %v810 = vmul.f32 %v808, %v808
        %811 = vadd.xlane.f32.xlu0 %v809
        %v812 = vpop.xlane.xlu0 %811
        %813 = vadd.xlane.f32.xlu0 %v810
        %v814 = vpop.xlane.xlu0 %813
        %v815 = vmul.f32 %v812, 0.03125
        %v816 = vmul.f32 %v814, 0.03125
        %v817 = vadd.f32 %v815, 1e-05
        %v818 = vadd.f32 %v816, 1e-05
        %v819 = vrsqrt.pop %v817
        %v820 = vmul.f32 %v819, %v817
        %v821 = vmul.f32 %v820, %v819
        %v822 = vmul.f32 0.5, %v821
        %v823 = vsub.f32 1.5, %v822
        %v824 = vmul.f32 %v819, %v823
        %vm825 = vweird.f32 %v817
        %vm826 = vweird.f32 %v819
        %vm827 = vmor %vm825, %vm826
        %v828 = vsel %vm827, %v819, %v824
        %v829 = vrsqrt.pop %v818
        %v830 = vmul.f32 %v829, %v818
        %v831 = vmul.f32 %v830, %v829
        %v832 = vmul.f32 0.5, %v831
        %v833 = vsub.f32 1.5, %v832
        %v834 = vmul.f32 %v829, %v833
        %vm835 = vweird.f32 %v818
        %vm836 = vweird.f32 %v829
        %vm837 = vmor %vm835, %vm836
        %v838 = vsel %vm837, %v829, %v834
        %v839 = vmul.f32 %v807, %v828
        %v840 = vmul.f32 %v808, %v838
        %v841 = vperm.slane %v797, 0
        %v842 = vmul.f32 %v839, %v841
        %v843 = vmul.f32 %v840, %v841
        %v844 = vperm.slane %v798, 0
        %v845 = vadd.f32 %v842, %v844
        %v846 = vadd.f32 %v843, %v844
        %v847 = vld [vmem:[%s414 + $0x60] sm:$0xff]
        %v848 = vld [vmem:[%s414 + $0x68] sm:$0xff]
        %v849 = vld [vmem:[%s414 + $0x70] sm:$0xff]
        %v850 = vld [vmem:[%s414 + $0x78] sm:$0xff]
        %v851 = vld [vmem:[%s404 + $0xf] sm:$0x1]
        %v852 = vperm.slane %v851, 0
        %v854 = vsel %vm562, %v845, 0
        %v857 = vsel %vm562, %v846, 0
        %859 = vmatpush.msra.mxu0 0.0
        %860 = vmatpush.msra.mxu0 0.0
        %861 = vmatpush.msra.mxu0 0.0
        %862 = vmatpush.msra.mxu0 0.0
        %863 = vmatpush.msra.mxu0 0.0
        %864 = vmatpush.msra.mxu0 0.0
        %865 = vmatpush.msra.mxu0 0.0
        %866 = vmatpush.msra.mxu0 0.0
        %867 = vmatpush.msra.mxu0 0.0
        %868 = vmatpush.msra.mxu0 0.0
        %869 = vmatpush.msra.mxu0 0.0
        %870 = vmatpush.msra.mxu0 0.0
        %871 = vmatpush.msra.mxu0 %v850
        %872 = vmatpush.msra.mxu0 %v849
        %873 = vmatpush.msra.mxu0 %v848
        %874 = vmatpush.msra.mxu0 %v847
        %875 = vmatmul.f32.gmra.mxu0 %v854
        %v876 = vpop.f32.mrf.mxu0
        %v877 = vadd.f32 %v852, %v876
        %878 = vmatmul.f32.gmra.mxu0 %v857
        %v879 = vpop.f32.mrf.mxu0
        %v880 = vadd.f32 %v852, %v879
        %881 = vdwg.mxu0
        %v882 = vadd.f32 %v500, %v877
        %v883 = vadd.f32 %v501, %v880
        %v884 = vld [vmem:[%s404 + $0x2] sm:$0x1]
        %v885 = vld [vmem:[%s404 + $0x8] sm:$0x1]
        %886 = vadd.xlane.f32.xlu0 %v882
        %v887 = vpop.xlane.xlu0 %886
        %888 = vadd.xlane.f32.xlu0 %v883
        %v889 = vpop.xlane.xlu0 %888
        %v890 = vmul.f32 %v887, 0.03125
        %v891 = vmul.f32 %v889, 0.03125
        %v892 = vsub.f32 %v882, %v890
        %v893 = vsub.f32 %v883, %v891
        %v894 = vmul.f32 %v892, %v489
        %v895 = vmul.f32 %v893, %v489
        %v896 = vmul.f32 %v894, %v894
        %v897 = vmul.f32 %v895, %v895
        %898 = vadd.xlane.f32.xlu0 %v896
        %v899 = vpop.xlane.xlu0 %898
        %900 = vadd.xlane.f32.xlu0 %v897
        %v901 = vpop.xlane.xlu0 %900
        %v902 = vmul.f32 %v899, 0.03125
        %v903 = vmul.f32 %v901, 0.03125
        %v904 = vadd.f32 %v902, 1e-05
        %v905 = vadd.f32 %v903, 1e-05
        %v906 = vrsqrt.pop %v904
        %v907 = vmul.f32 %v906, %v904
        %v908 = vmul.f32 %v907, %v906
        %v909 = vmul.f32 0.5, %v908
        %v910 = vsub.f32 1.5, %v909
        %v911 = vmul.f32 %v906, %v910
        %vm912 = vweird.f32 %v904
        %vm913 = vweird.f32 %v906
        %vm914 = vmor %vm912, %vm913
        %v915 = vsel %vm914, %v906, %v911
        %v916 = vrsqrt.pop %v905
        %v917 = vmul.f32 %v916, %v905
        %v918 = vmul.f32 %v917, %v916
        %v919 = vmul.f32 0.5, %v918
        %v920 = vsub.f32 1.5, %v919
        %v921 = vmul.f32 %v916, %v920
        %vm922 = vweird.f32 %v905
        %vm923 = vweird.f32 %v916
        %vm924 = vmor %vm922, %vm923
        %v925 = vsel %vm924, %v916, %v921
        %v926 = vmul.f32 %v894, %v915
        %v927 = vmul.f32 %v895, %v925
        %v928 = vperm.slane %v884, 0
        %v929 = vmul.f32 %v926, %v928
        %v930 = vmul.f32 %v927, %v928
        %v931 = vperm.slane %v885, 0
        %v932 = vadd.f32 %v929, %v931
        %v933 = vadd.f32 %v930, %v931
        %v934 = vld [vmem:[%s404 + $0x3] sm:$0x1]
        %v935 = vld [vmem:[%s404 + $0x9] sm:$0x1]
        %936 = vadd.xlane.f32.xlu0 %v502
        %v937 = vpop.xlane.xlu0 %936
        %938 = vadd.xlane.f32.xlu0 %v503
        %v939 = vpop.xlane.xlu0 %938
        %940 = vadd.xlane.f32.xlu0 %v504
        %v941 = vpop.xlane.xlu0 %940
        %942 = vadd.xlane.f32.xlu0 %v505
        %v943 = vpop.xlane.xlu0 %942
        %v944 = vmul.f32 %v937, 0.03125
        %v945 = vmul.f32 %v939, 0.03125
        %v946 = vmul.f32 %v941, 0.03125
        %v947 = vmul.f32 %v943, 0.03125
        %v948 = vsub.f32 %v502, %v944
        %v949 = vsub.f32 %v503, %v945
        %v950 = vsub.f32 %v504, %v946
        %v951 = vsub.f32 %v505, %v947
        %v952 = vmul.f32 %v948, %v489
        %v953 = vmul.f32 %v949, %v489
        %v954 = vmul.f32 %v950, %v489
        %v955 = vmul.f32 %v951, %v489
        %v956 = vmul.f32 %v952, %v952
        %v957 = vmul.f32 %v953, %v953
        %v958 = vmul.f32 %v954, %v954
        %v959 = vmul.f32 %v955, %v955
        %960 = vadd.xlane.f32.xlu0 %v956
        %v961 = vpop.xlane.xlu0 %960
        %962 = vadd.xlane.f32.xlu0 %v957
        %v963 = vpop.xlane.xlu0 %962
        %964 = vadd.xlane.f32.xlu0 %v958
        %v965 = vpop.xlane.xlu0 %964
        %966 = vadd.xlane.f32.xlu0 %v959
        %v967 = vpop.xlane.xlu0 %966
        %v968 = vmul.f32 %v961, 0.03125
        %v969 = vmul.f32 %v963, 0.03125
        %v970 = vmul.f32 %v965, 0.03125
        %v971 = vmul.f32 %v967, 0.03125
        %v972 = vadd.f32 %v968, 1e-05
        %v973 = vadd.f32 %v969, 1e-05
        %v974 = vadd.f32 %v970, 1e-05
        %v975 = vadd.f32 %v971, 1e-05
        %v976 = vrsqrt.pop %v972
        %v977 = vmul.f32 %v976, %v972
        %v978 = vmul.f32 %v977, %v976
        %v979 = vmul.f32 0.5, %v978
        %v980 = vsub.f32 1.5, %v979
        %v981 = vmul.f32 %v976, %v980
        %vm982 = vweird.f32 %v972
        %vm983 = vweird.f32 %v976
        %vm984 = vmor %vm982, %vm983
        %v985 = vsel %vm984, %v976, %v981
        %v986 = vrsqrt.pop %v973
        %v987 = vmul.f32 %v986, %v973
        %v988 = vmul.f32 %v987, %v986
        %v989 = vmul.f32 0.5, %v988
        %v990 = vsub.f32 1.5, %v989
        %v991 = vmul.f32 %v986, %v990
        %vm992 = vweird.f32 %v973
        %vm993 = vweird.f32 %v986
        %vm994 = vmor %vm992, %vm993
        %v995 = vsel %vm994, %v986, %v991
        %v996 = vrsqrt.pop %v974
        %v997 = vmul.f32 %v996, %v974
        %v998 = vmul.f32 %v997, %v996
        %v999 = vmul.f32 0.5, %v998
        %v1000 = vsub.f32 1.5, %v999
        %v1001 = vmul.f32 %v996, %v1000
        %vm1002 = vweird.f32 %v974
        %vm1003 = vweird.f32 %v996
        %vm1004 = vmor %vm1002, %vm1003
        %v1005 = vsel %vm1004, %v996, %v1001
        %v1006 = vrsqrt.pop %v975
        %v1007 = vmul.f32 %v1006, %v975
        %v1008 = vmul.f32 %v1007, %v1006
        %v1009 = vmul.f32 0.5, %v1008
        %v1010 = vsub.f32 1.5, %v1009
        %v1011 = vmul.f32 %v1006, %v1010
        %vm1012 = vweird.f32 %v975
        %vm1013 = vweird.f32 %v1006
        %vm1014 = vmor %vm1012, %vm1013
        %v1015 = vsel %vm1014, %v1006, %v1011
        %v1016 = vmul.f32 %v952, %v985
        %v1017 = vmul.f32 %v953, %v995
        %v1018 = vmul.f32 %v954, %v1005
        %v1019 = vmul.f32 %v955, %v1015
        %v1020 = vperm.slane %v934, 0
        %v1021 = vmul.f32 %v1016, %v1020
        %v1022 = vmul.f32 %v1017, %v1020
        %v1023 = vmul.f32 %v1018, %v1020
        %v1024 = vmul.f32 %v1019, %v1020
        %v1025 = vperm.slane %v935, 0
        %v1026 = vadd.f32 %v1021, %v1025
        %v1027 = vadd.f32 %v1022, %v1025
        %v1028 = vadd.f32 %v1023, %v1025
        %v1029 = vadd.f32 %v1024, %v1025
        %v1030 = vld [vmem:[%s414 + $0x80] sm:$0xff]
        %v1031 = vld [vmem:[%s414 + $0x88] sm:$0xff]
        %v1032 = vld [vmem:[%s414 + $0x90] sm:$0xff]
        %v1033 = vld [vmem:[%s414 + $0x98] sm:$0xff]
        %v1034 = vld [vmem:[%s404 + $0x10] sm:$0x1]
        %v1035 = vperm.slane %v1034, 0
        %v1037 = vsel %vm562, %v932, 0
        %v1040 = vsel %vm562, %v933, 0
        %1042 = vmatpush.msra.mxu0 0.0
        %1043 = vmatpush.msra.mxu0 0.0
        %1044 = vmatpush.msra.mxu0 0.0
        %1045 = vmatpush.msra.mxu0 0.0
        %1046 = vmatpush.msra.mxu0 0.0
        %1047 = vmatpush.msra.mxu0 0.0
        %1048 = vmatpush.msra.mxu0 0.0
        %1049 = vmatpush.msra.mxu0 0.0
        %1050 = vmatpush.msra.mxu0 0.0
        %1051 = vmatpush.msra.mxu0 0.0
        %1052 = vmatpush.msra.mxu0 0.0
        %1053 = vmatpush.msra.mxu0 0.0
        %1054 = vmatpush.msra.mxu0 %v1033
        %1055 = vmatpush.msra.mxu0 %v1032
        %1056 = vmatpush.msra.mxu0 %v1031
        %1057 = vmatpush.msra.mxu0 %v1030
        %1058 = vmatmul.f32.gmra.mxu0 %v1037
        %v1059 = vpop.f32.mrf.mxu0
        %v1060 = vadd.f32 %v1035, %v1059
        %1061 = vmatmul.f32.gmra.mxu0 %v1040
        %v1062 = vpop.f32.mrf.mxu0
        %v1063 = vadd.f32 %v1035, %v1062
        %1064 = vdwg.mxu0
        %v1065 = vld [vmem:[%s414 + $0xa0] sm:$0xff]
        %v1066 = vld [vmem:[%s414 + $0xa8] sm:$0xff]
        %v1067 = vld [vmem:[%s414 + $0xb0] sm:$0xff]
        %v1068 = vld [vmem:[%s414 + $0xb8] sm:$0xff]
        %v1069 = vld [vmem:[%s404 + $0x11] sm:$0x1]
        %v1070 = vperm.slane %v1069, 0
        %v1072 = vsel %vm562, %v1026, 0
        %v1075 = vsel %vm562, %v1027, 0
        %v1078 = vsel %vm562, %v1028, 0
        %v1081 = vsel %vm562, %v1029, 0
        %1083 = vmatpush.msra.mxu0 0.0
        %1084 = vmatpush.msra.mxu0 0.0
        %1085 = vmatpush.msra.mxu0 0.0
        %1086 = vmatpush.msra.mxu0 0.0
        %1087 = vmatpush.msra.mxu0 0.0
        %1088 = vmatpush.msra.mxu0 0.0
        %1089 = vmatpush.msra.mxu0 0.0
        %1090 = vmatpush.msra.mxu0 0.0
        %1091 = vmatpush.msra.mxu0 0.0
        %1092 = vmatpush.msra.mxu0 0.0
        %1093 = vmatpush.msra.mxu0 0.0
        %1094 = vmatpush.msra.mxu0 0.0
        %1095 = vmatpush.msra.mxu0 %v1068
        %1096 = vmatpush.msra.mxu0 %v1067
        %1097 = vmatpush.msra.mxu0 %v1066
        %1098 = vmatpush.msra.mxu0 %v1065
        %1099 = vmatmul.f32.gmra.mxu0 %v1072
        %v1100 = vpop.f32.mrf.mxu0
        %v1101 = vadd.f32 %v1070, %v1100
        %1102 = vmatmul.f32.gmra.mxu0 %v1075
        %v1103 = vpop.f32.mrf.mxu0
        %v1104 = vadd.f32 %v1070, %v1103
        %1105 = vmatmul.f32.gmra.mxu0 %v1078
        %v1106 = vpop.f32.mrf.mxu0
        %v1107 = vadd.f32 %v1070, %v1106
        %1108 = vmatmul.f32.gmra.mxu0 %v1081
        %v1109 = vpop.f32.mrf.mxu0
        %v1110 = vadd.f32 %v1070, %v1109
        %1111 = vdwg.mxu0
        %v1112 = vld [vmem:[%s414 + $0xc0] sm:$0xff]
        %v1113 = vld [vmem:[%s414 + $0xc8] sm:$0xff]
        %v1114 = vld [vmem:[%s414 + $0xd0] sm:$0xff]
        %v1115 = vld [vmem:[%s414 + $0xd8] sm:$0xff]
        %v1116 = vld [vmem:[%s404 + $0x12] sm:$0x1]
        %v1117 = vperm.slane %v1116, 0
        %1118 = vmatpush.msra.mxu0 0.0
        %1119 = vmatpush.msra.mxu0 0.0
        %1120 = vmatpush.msra.mxu0 0.0
        %1121 = vmatpush.msra.mxu0 0.0
        %1122 = vmatpush.msra.mxu0 0.0
        %1123 = vmatpush.msra.mxu0 0.0
        %1124 = vmatpush.msra.mxu0 0.0
        %1125 = vmatpush.msra.mxu0 0.0
        %1126 = vmatpush.msra.mxu0 0.0
        %1127 = vmatpush.msra.mxu0 0.0
        %1128 = vmatpush.msra.mxu0 0.0
        %1129 = vmatpush.msra.mxu0 0.0
        %1130 = vmatpush.msra.mxu0 %v1115
        %1131 = vmatpush.msra.mxu0 %v1114
        %1132 = vmatpush.msra.mxu0 %v1113
        %1133 = vmatpush.msra.mxu0 %v1112
        %1134 = vmatmul.f32.gmra.mxu0 %v1072
        %v1135 = vpop.f32.mrf.mxu0
        %v1136 = vadd.f32 %v1117, %v1135
        %1137 = vmatmul.f32.gmra.mxu0 %v1075
        %v1138 = vpop.f32.mrf.mxu0
        %v1139 = vadd.f32 %v1117, %v1138
        %1140 = vmatmul.f32.gmra.mxu0 %v1078
        %v1141 = vpop.f32.mrf.mxu0
        %v1142 = vadd.f32 %v1117, %v1141
        %1143 = vmatmul.f32.gmra.mxu0 %v1081
        %v1144 = vpop.f32.mrf.mxu0
        %v1145 = vadd.f32 %v1117, %v1144
        %1146 = vdwg.mxu0
        %v1148 = vsel %vm562, %v1060, 0
        %v1151 = vsel %vm562, %v1101, 0
        %v1154 = vsel %vm562, %v1104, 0
        %1156 = vmatpush.xpose.msra.mxu0 0.0
        %1157 = vmatpush.xpose.msra.mxu0 0.0
        %1158 = vmatpush.xpose.msra.mxu0 0.0
        %1159 = vmatpush.xpose.msra.mxu0 0.0
        %1160 = vmatpush.xpose.msra.mxu0 0.0
        %1161 = vmatpush.xpose.msra.mxu0 0.0
        %1162 = vmatpush.xpose.msra.mxu0 0.0
        %1163 = vmatpush.xpose.msra.mxu0 0.0
        %1164 = vmatpush.xpose.msra.mxu0 0.0
        %1165 = vmatpush.xpose.msra.mxu0 0.0
        %1166 = vmatpush.xpose.msra.mxu0 0.0
        %1167 = vmatpush.xpose.msra.mxu0 0.0
        %1168 = vmatpush.xpose.msra.mxu0 0.0
        %1169 = vmatpush.xpose.msra.mxu0 0.0
        %1170 = vmatpush.xpose.msra.mxu0 %v1154
        %1171 = vmatpush.xpose.msra.mxu0 %v1151
        %1172 = vmatmul.f32.gmra.mxu0 %v1148
        %v1173 = vpop.f32.mrf.mxu0
        %v1174 = vadd.f32 %v491, %v1173
        %1175 = vdwg.mxu0
        %vm1176 = vcmask 130048
        %v1177 = vsel %vm1176, %v1174, -inf
        %1178 = vmax.xlane.f32.xlu0 %v1177
        %v1179 = vpop.xlane.xlu0 %1178
        %v1180 = vsub.f32 %v1174, %v1179
        %v1181 = vmul.f32 %v1180, 1.442695
        %v1182 = vpow.pop %v1181
        %v1183 = vsel %vm1176, %v1182, 0.0
        %1184 = vadd.xlane.f32.xlu0 %v1183
        %v1185 = vpop.xlane.xlu0 %1184
        %v1186 = vrcp.pop %v1185
        %v1187 = vmul.f32 %v1185, %v1186
        %v1188 = vsub.f32 1.0, %v1187
        %v1189 = vmul.f32 %v1186, %v1188
        %v1190 = vadd.f32 %v1186, %v1189
        %vm1191 = vweird.f32 %v1185
        %vm1192 = vweird.f32 %v1186
        %vm1193 = vmor %vm1191, %vm1192
        %v1194 = vsel %vm1193, %v1186, %v1190
        %v1195 = vand.u32 2147483647, %v1185
        %vm1196 = vcmp.eq.f32.partialorder %v1195, 8.507059e+37
        %v1197 = vand.u32 %v1185, 2147483648
        %v1198 = vor.u32 1.1754944e-38, %v1197
        %v1199 = vsel %vm1196, %v1198, %v1194
        %v1200 = vmul.f32 %v1182, %v1199
        %v1202 = vsel %vm1176, %v1200, 0
        %1204 = vmatpush.msra.mxu0 0.0
        %1205 = vmatpush.msra.mxu0 0.0
        %1206 = vmatpush.msra.mxu0 0.0
        %1207 = vmatpush.msra.mxu0 0.0
        %1208 = vmatpush.msra.mxu0 0.0
        %1209 = vmatpush.msra.mxu0 0.0
        %1210 = vmatpush.msra.mxu0 0.0
        %1211 = vmatpush.msra.mxu0 0.0
        %1212 = vmatpush.msra.mxu0 0.0
        %1213 = vmatpush.msra.mxu0 0.0
        %1214 = vmatpush.msra.mxu0 0.0
        %1215 = vmatpush.msra.mxu0 0.0
        %1216 = vmatpush.msra.mxu0 0.0
        %1217 = vmatpush.msra.mxu0 0.0
        %1218 = vmatpush.msra.mxu0 %v1139
        %1219 = vmatpush.msra.mxu0 %v1136
        %1220 = vmatmul.f32.gmra.mxu0 %v1202
        %v1221 = vpop.f32.mrf.mxu0
        %v1222 = vadd.f32 0.0, %v1221
        %1223 = vdwg.mxu0
        %v1225 = vsel %vm562, %v1063, 0
        %v1228 = vsel %vm562, %v1107, 0
        %v1231 = vsel %vm562, %v1110, 0
        %1233 = vmatpush.xpose.msra.mxu0 0.0
        %1234 = vmatpush.xpose.msra.mxu0 0.0
        %1235 = vmatpush.xpose.msra.mxu0 0.0
        %1236 = vmatpush.xpose.msra.mxu0 0.0
        %1237 = vmatpush.xpose.msra.mxu0 0.0
        %1238 = vmatpush.xpose.msra.mxu0 0.0
        %1239 = vmatpush.xpose.msra.mxu0 0.0
        %1240 = vmatpush.xpose.msra.mxu0 0.0
        %1241 = vmatpush.xpose.msra.mxu0 0.0
        %1242 = vmatpush.xpose.msra.mxu0 0.0
        %1243 = vmatpush.xpose.msra.mxu0 0.0
        %1244 = vmatpush.xpose.msra.mxu0 0.0
        %1245 = vmatpush.xpose.msra.mxu0 0.0
        %1246 = vmatpush.xpose.msra.mxu0 0.0
        %1247 = vmatpush.xpose.msra.mxu0 %v1231
        %1248 = vmatpush.xpose.msra.mxu0 %v1228
        %1249 = vmatmul.f32.gmra.mxu0 %v1225
        %v1250 = vpop.f32.mrf.mxu0
        %v1251 = vadd.f32 %v491, %v1250
        %1252 = vdwg.mxu0
        %v1253 = vsel %vm1176, %v1251, -inf
        %1254 = vmax.xlane.f32.xlu0 %v1253
        %v1255 = vpop.xlane.xlu0 %1254
        %v1256 = vsub.f32 %v1251, %v1255
        %v1257 = vmul.f32 %v1256, 1.442695
        %v1258 = vpow.pop %v1257
        %v1259 = vsel %vm1176, %v1258, 0.0
        %1260 = vadd.xlane.f32.xlu0 %v1259
        %v1261 = vpop.xlane.xlu0 %1260
        %v1262 = vrcp.pop %v1261
        %v1263 = vmul.f32 %v1261, %v1262
        %v1264 = vsub.f32 1.0, %v1263
        %v1265 = vmul.f32 %v1262, %v1264
        %v1266 = vadd.f32 %v1262, %v1265
        %vm1267 = vweird.f32 %v1261
        %vm1268 = vweird.f32 %v1262
        %vm1269 = vmor %vm1267, %vm1268
        %v1270 = vsel %vm1269, %v1262, %v1266
        %v1271 = vand.u32 2147483647, %v1261
        %vm1272 = vcmp.eq.f32.partialorder %v1271, 8.507059e+37
        %v1273 = vand.u32 %v1261, 2147483648
        %v1274 = vor.u32 1.1754944e-38, %v1273
        %v1275 = vsel %vm1272, %v1274, %v1270
        %v1276 = vmul.f32 %v1258, %v1275
        %v1278 = vsel %vm1176, %v1276, 0
        %1280 = vmatpush.msra.mxu0 0.0
        %1281 = vmatpush.msra.mxu0 0.0
        %1282 = vmatpush.msra.mxu0 0.0
        %1283 = vmatpush.msra.mxu0 0.0
        %1284 = vmatpush.msra.mxu0 0.0
        %1285 = vmatpush.msra.mxu0 0.0
        %1286 = vmatpush.msra.mxu0 0.0
        %1287 = vmatpush.msra.mxu0 0.0
        %1288 = vmatpush.msra.mxu0 0.0
        %1289 = vmatpush.msra.mxu0 0.0
        %1290 = vmatpush.msra.mxu0 0.0
        %1291 = vmatpush.msra.mxu0 0.0
        %1292 = vmatpush.msra.mxu0 0.0
        %1293 = vmatpush.msra.mxu0 0.0
        %1294 = vmatpush.msra.mxu0 %v1145
        %1295 = vmatpush.msra.mxu0 %v1142
        %1296 = vmatmul.f32.gmra.mxu0 %v1278
        %v1297 = vpop.f32.mrf.mxu0
        %v1298 = vadd.f32 0.0, %v1297
        %1299 = vdwg.mxu0
        %v1300 = vld [vmem:[%s404 + $0x4] sm:$0x1]
        %v1301 = vld [vmem:[%s404 + $0xa] sm:$0x1]
        %1302 = vadd.xlane.f32.xlu0 %v1222
        %v1303 = vpop.xlane.xlu0 %1302
        %1304 = vadd.xlane.f32.xlu0 %v1298
        %v1305 = vpop.xlane.xlu0 %1304
        %v1306 = vmul.f32 %v1303, 0.03125
        %v1307 = vmul.f32 %v1305, 0.03125
        %v1308 = vsub.f32 %v1222, %v1306
        %v1309 = vsub.f32 %v1298, %v1307
        %v1310 = vmul.f32 %v1308, %v489
        %v1311 = vmul.f32 %v1309, %v489
        %v1312 = vmul.f32 %v1310, %v1310
        %v1313 = vmul.f32 %v1311, %v1311
        %1314 = vadd.xlane.f32.xlu0 %v1312
        %v1315 = vpop.xlane.xlu0 %1314
        %1316 = vadd.xlane.f32.xlu0 %v1313
        %v1317 = vpop.xlane.xlu0 %1316
        %v1318 = vmul.f32 %v1315, 0.03125
        %v1319 = vmul.f32 %v1317, 0.03125
        %v1320 = vadd.f32 %v1318, 1e-05
        %v1321 = vadd.f32 %v1319, 1e-05
        %v1322 = vrsqrt.pop %v1320
        %v1323 = vmul.f32 %v1322, %v1320
        %v1324 = vmul.f32 %v1323, %v1322
        %v1325 = vmul.f32 0.5, %v1324
        %v1326 = vsub.f32 1.5, %v1325
        %v1327 = vmul.f32 %v1322, %v1326
        %vm1328 = vweird.f32 %v1320
        %vm1329 = vweird.f32 %v1322
        %vm1330 = vmor %vm1328, %vm1329
        %v1331 = vsel %vm1330, %v1322, %v1327
        %v1332 = vrsqrt.pop %v1321
        %v1333 = vmul.f32 %v1332, %v1321
        %v1334 = vmul.f32 %v1333, %v1332
        %v1335 = vmul.f32 0.5, %v1334
        %v1336 = vsub.f32 1.5, %v1335
        %v1337 = vmul.f32 %v1332, %v1336
        %vm1338 = vweird.f32 %v1321
        %vm1339 = vweird.f32 %v1332
        %vm1340 = vmor %vm1338, %vm1339
        %v1341 = vsel %vm1340, %v1332, %v1337
        %v1342 = vmul.f32 %v1310, %v1331
        %v1343 = vmul.f32 %v1311, %v1341
        %v1344 = vperm.slane %v1300, 0
        %v1345 = vmul.f32 %v1342, %v1344
        %v1346 = vmul.f32 %v1343, %v1344
        %v1347 = vperm.slane %v1301, 0
        %v1348 = vadd.f32 %v1345, %v1347
        %v1349 = vadd.f32 %v1346, %v1347
        %v1350 = vld [vmem:[%s414 + $0xe0] sm:$0xff]
        %v1351 = vld [vmem:[%s414 + $0xe8] sm:$0xff]
        %v1352 = vld [vmem:[%s414 + $0xf0] sm:$0xff]
        %v1353 = vld [vmem:[%s414 + $0xf8] sm:$0xff]
        %v1354 = vld [vmem:[%s404 + $0x13] sm:$0x1]
        %v1355 = vperm.slane %v1354, 0
        %v1357 = vsel %vm562, %v1348, 0
        %v1360 = vsel %vm562, %v1349, 0
        %1362 = vmatpush.msra.mxu0 0.0
        %1363 = vmatpush.msra.mxu0 0.0
        %1364 = vmatpush.msra.mxu0 0.0
        %1365 = vmatpush.msra.mxu0 0.0
        %1366 = vmatpush.msra.mxu0 0.0
        %1367 = vmatpush.msra.mxu0 0.0
        %1368 = vmatpush.msra.mxu0 0.0
        %1369 = vmatpush.msra.mxu0 0.0
        %1370 = vmatpush.msra.mxu0 0.0
        %1371 = vmatpush.msra.mxu0 0.0
        %1372 = vmatpush.msra.mxu0 0.0
        %1373 = vmatpush.msra.mxu0 0.0
        %1374 = vmatpush.msra.mxu0 %v1353
        %1375 = vmatpush.msra.mxu0 %v1352
        %1376 = vmatpush.msra.mxu0 %v1351
        %1377 = vmatpush.msra.mxu0 %v1350
        %1378 = vmatmul.f32.gmra.mxu0 %v1357
        %v1379 = vpop.f32.mrf.mxu0
        %v1380 = vadd.f32 %v1355, %v1379
        %1381 = vmatmul.f32.gmra.mxu0 %v1360
        %v1382 = vpop.f32.mrf.mxu0
        %v1383 = vadd.f32 %v1355, %v1382
        %1384 = vdwg.mxu0
        %v1385 = vadd.f32 %v882, %v1380
        %v1386 = vadd.f32 %v883, %v1383
        %v1387 = vld [vmem:[%s404 + $0x5] sm:$0x1]
        %v1388 = vld [vmem:[%s404 + $0xb] sm:$0x1]
        %1389 = vadd.xlane.f32.xlu0 %v1385
        %v1390 = vpop.xlane.xlu0 %1389
        %1391 = vadd.xlane.f32.xlu0 %v1386
        %v1392 = vpop.xlane.xlu0 %1391
        %v1393 = vmul.f32 %v1390, 0.03125
        %v1394 = vmul.f32 %v1392, 0.03125
        %v1395 = vsub.f32 %v1385, %v1393
        %v1396 = vsub.f32 %v1386, %v1394
        %v1397 = vmul.f32 %v1395, %v489
        %v1398 = vmul.f32 %v1396, %v489
        %v1399 = vmul.f32 %v1397, %v1397
        %v1400 = vmul.f32 %v1398, %v1398
        %1401 = vadd.xlane.f32.xlu0 %v1399
        %v1402 = vpop.xlane.xlu0 %1401
        %1403 = vadd.xlane.f32.xlu0 %v1400
        %v1404 = vpop.xlane.xlu0 %1403
        %v1405 = vmul.f32 %v1402, 0.03125
        %v1406 = vmul.f32 %v1404, 0.03125
        %v1407 = vadd.f32 %v1405, 1e-05
        %v1408 = vadd.f32 %v1406, 1e-05
        %v1409 = vrsqrt.pop %v1407
        %v1410 = vmul.f32 %v1409, %v1407
        %v1411 = vmul.f32 %v1410, %v1409
        %v1412 = vmul.f32 0.5, %v1411
        %v1413 = vsub.f32 1.5, %v1412
        %v1414 = vmul.f32 %v1409, %v1413
        %vm1415 = vweird.f32 %v1407
        %vm1416 = vweird.f32 %v1409
        %vm1417 = vmor %vm1415, %vm1416
        %v1418 = vsel %vm1417, %v1409, %v1414
        %v1419 = vrsqrt.pop %v1408
        %v1420 = vmul.f32 %v1419, %v1408
        %v1421 = vmul.f32 %v1420, %v1419
        %v1422 = vmul.f32 0.5, %v1421
        %v1423 = vsub.f32 1.5, %v1422
        %v1424 = vmul.f32 %v1419, %v1423
        %vm1425 = vweird.f32 %v1408
        %vm1426 = vweird.f32 %v1419
        %vm1427 = vmor %vm1425, %vm1426
        %v1428 = vsel %vm1427, %v1419, %v1424
        %v1429 = vmul.f32 %v1397, %v1418
        %v1430 = vmul.f32 %v1398, %v1428
        %v1431 = vperm.slane %v1387, 0
        %v1432 = vmul.f32 %v1429, %v1431
        %v1433 = vmul.f32 %v1430, %v1431
        %v1434 = vperm.slane %v1388, 0
        %v1435 = vadd.f32 %v1432, %v1434
        %v1436 = vadd.f32 %v1433, %v1434
        %v1437 = vld [vmem:[%s424] sm:$0xff]
        %v1438 = vld [vmem:[%s424 + $0x8] sm:$0xff]
        %v1439 = vld [vmem:[%s424 + $0x10] sm:$0xff]
        %v1440 = vld [vmem:[%s424 + $0x18] sm:$0xff]
        %v1441 = vld [vmem:[%s483] sm:$0x1]
        %v1443 = vperm.slane %v1441, 0
        %v1446 = vsel %vm562, %v1435, 0
        %v1449 = vsel %vm562, %v1436, 0
        %1451 = vmatpush.msra.mxu0 0.0
        %1452 = vmatpush.msra.mxu0 0.0
        %1453 = vmatpush.msra.mxu0 0.0
        %1454 = vmatpush.msra.mxu0 0.0
        %1455 = vmatpush.msra.mxu0 0.0
        %1456 = vmatpush.msra.mxu0 0.0
        %1457 = vmatpush.msra.mxu0 0.0
        %1458 = vmatpush.msra.mxu0 0.0
        %1459 = vmatpush.msra.mxu0 0.0
        %1460 = vmatpush.msra.mxu0 0.0
        %1461 = vmatpush.msra.mxu0 0.0
        %1462 = vmatpush.msra.mxu0 0.0
        %1463 = vmatpush.msra.mxu0 %v1440
        %1464 = vmatpush.msra.mxu0 %v1439
        %1465 = vmatpush.msra.mxu0 %v1438
        %1466 = vmatpush.msra.mxu0 %v1437
        %1467 = vmatmul.f32.gmra.mxu0 %v1446
        %v1468 = vpop.f32.mrf.mxu0
        %v1469 = vadd.f32 %v1443, %v1468
        %1470 = vmatmul.f32.gmra.mxu0 %v1449
        %v1471 = vpop.f32.mrf.mxu0
        %v1472 = vadd.f32 %v1443, %v1471
        %1473 = vdwg.mxu0
        %vm1474 = vcmp.gt.f32.partialorder %v1469, 0.0
        %vm1475 = vcmp.gt.f32.partialorder %v1472, 0.0
        %v1476 = vmul.f32 %v1469, 0.1
        %v1477 = vmul.f32 %v1472, 0.1
        %v1478 = vsel %vm1474, %v1469, %v1476
        %v1479 = vsel %vm1475, %v1472, %v1477
        %v1480 = vld [vmem:[%s434] sm:$0xff]
        %v1481 = vld [vmem:[%s434 + $0x8] sm:$0xff]
        %v1482 = vld [vmem:[%s434 + $0x10] sm:$0xff]
        %v1483 = vld [vmem:[%s434 + $0x18] sm:$0xff]
        %v1484 = vld [vmem:[%s404 + $0x14] sm:$0x1]
        %v1485 = vperm.slane %v1484, 0
        %v1487 = vsel %vm562, %v1478, 0
        %v1490 = vsel %vm562, %v1479, 0
        %1492 = vmatpush.msra.mxu0 0.0
        %1493 = vmatpush.msra.mxu0 0.0
        %1494 = vmatpush.msra.mxu0 0.0
        %1495 = vmatpush.msra.mxu0 0.0
        %1496 = vmatpush.msra.mxu0 0.0
        %1497 = vmatpush.msra.mxu0 0.0
        %1498 = vmatpush.msra.mxu0 0.0
        %1499 = vmatpush.msra.mxu0 0.0
        %1500 = vmatpush.msra.mxu0 0.0
        %1501 = vmatpush.msra.mxu0 0.0
        %1502 = vmatpush.msra.mxu0 0.0
        %1503 = vmatpush.msra.mxu0 0.0
        %1504 = vmatpush.msra.mxu0 %v1483
        %1505 = vmatpush.msra.mxu0 %v1482
        %1506 = vmatpush.msra.mxu0 %v1481
        %1507 = vmatpush.msra.mxu0 %v1480
        %1508 = vmatmul.f32.gmra.mxu0 %v1487
        %v1509 = vpop.f32.mrf.mxu0
        %v1510 = vadd.f32 %v1485, %v1509
        %1511 = vmatmul.f32.gmra.mxu0 %v1490
        %v1512 = vpop.f32.mrf.mxu0
        %v1513 = vadd.f32 %v1485, %v1512
        %1514 = vdwg.mxu0
        %v1515 = vadd.f32 %v1385, %v1510
        %v1516 = vadd.f32 %v1386, %v1513
        %1517 = vst [vmem:[#allocation2] sm:$0xff] %v1515
        %1518 = vst [vmem:[#allocation2 + $0x8] sm:$0xff] %v1516
        %p1519 = scmp.eq.s32.totalorder %s26, 2
        // Predicated region
        $region77: #{tpu_custom_call.1} parent=47 // pred_check
          %p1520 = pneg %p1519
        $region78: #{tpu_custom_call.1} parent=47 // pred_check_branch
          %1522 = sbr.rel (%p1520) target = $region80
        $region79: #{tpu_custom_call.1} parent=47 // pred_region
          %v1523 = vld [vmem:[%s404 + $0x15] sm:$0x1]
          %v1524 = vld [vmem:[%s404 + $0x16] sm:$0x1]
          %1525 = vadd.xlane.f32.xlu0 %v1515
          %v1526 = vpop.xlane.xlu0 %1525
          %1527 = vadd.xlane.f32.xlu0 %v1516
          %v1528 = vpop.xlane.xlu0 %1527
          %v1529 = vmul.f32 %v1526, 0.03125
          %v1530 = vmul.f32 %v1528, 0.03125
          %v1531 = vsub.f32 %v1515, %v1529
          %v1532 = vsub.f32 %v1516, %v1530
          %v1533 = vmul.f32 %v1531, %v489
          %v1534 = vmul.f32 %v1532, %v489
          %v1535 = vmul.f32 %v1533, %v1533
          %v1536 = vmul.f32 %v1534, %v1534
          %1537 = vadd.xlane.f32.xlu0 %v1535
          %v1538 = vpop.xlane.xlu0 %1537
          %1539 = vadd.xlane.f32.xlu0 %v1536
          %v1540 = vpop.xlane.xlu0 %1539
          %v1541 = vmul.f32 %v1538, 0.03125
          %v1542 = vmul.f32 %v1540, 0.03125
          %v1543 = vadd.f32 %v1541, 1e-05
          %v1544 = vadd.f32 %v1542, 1e-05
          %v1545 = vrsqrt.pop %v1543
          %v1546 = vmul.f32 %v1545, %v1543
          %v1547 = vmul.f32 %v1546, %v1545
          %v1548 = vmul.f32 0.5, %v1547
          %v1549 = vsub.f32 1.5, %v1548
          %v1550 = vmul.f32 %v1545, %v1549
          %vm1551 = vweird.f32 %v1543
          %vm1552 = vweird.f32 %v1545
          %vm1553 = vmor %vm1551, %vm1552
          %v1554 = vsel %vm1553, %v1545, %v1550
          %v1555 = vrsqrt.pop %v1544
          %v1556 = vmul.f32 %v1555, %v1544
          %v1557 = vmul.f32 %v1556, %v1555
          %v1558 = vmul.f32 0.5, %v1557
          %v1559 = vsub.f32 1.5, %v1558
          %v1560 = vmul.f32 %v1555, %v1559
          %vm1561 = vweird.f32 %v1544
          %vm1562 = vweird.f32 %v1555
          %vm1563 = vmor %vm1561, %vm1562
          %v1564 = vsel %vm1563, %v1555, %v1560
          %v1565 = vmul.f32 %v1533, %v1554
          %v1566 = vmul.f32 %v1534, %v1564
          %v1567 = vperm.slane %v1523, 0
          %v1568 = vmul.f32 %v1565, %v1567
          %v1569 = vmul.f32 %v1566, %v1567
          %v1570 = vperm.slane %v1524, 0
          %v1571 = vadd.f32 %v1568, %v1570
          %v1572 = vadd.f32 %v1569, %v1570
          %1573 = vst [vmem:[#allocation12] sm:$0xff] %v1571
          %1574 = vst [vmem:[#allocation12 + $0x8] sm:$0xff] %v1572
        $region80: #{tpu_custom_call.1} parent=47 // pred_fallthru
          _
        // Predicated region
        $region81: #{tpu_custom_call.1} parent=47 // pred_check
          %p1575 = pneg %p233
        $region82: #{tpu_custom_call.1} parent=47 // pred_check_branch
          %1577 = sbr.rel (%p1575) target = $region84
        $region83: #{tpu_custom_call.1} parent=47 // pred_region
          %s1578 = smul.u32 2, %s25
          %1580 = vsyncadd [#allocation5], 0
          %s1581 = smul.addr %s1578, 8
          %s1582 = scalar_lea.hbm %s7, %s1581
          %s1583 = sshll.u32 [#allocation12], 4
          %s1584 = int_to_ptr.vmem [resolvable:$true] %s1583
          %s1585 = sshll.u32 %s1582, 4
          %s1586 = int_to_ptr.hbm [resolvable:$true] %s1585
          %1591 = dma.vmem_to_hbm [thread:$0]  %s1584, 256, %s1586, [#allocation5], 128, 128, 8
        $region84: #{tpu_custom_call.1} parent=47 // pred_fallthru
          _
        // Predicated region
        $region85: #{tpu_custom_call.1} parent=47 // pred_check
          %p1592 = pneg %p233
        $region86: #{tpu_custom_call.1} parent=47 // pred_check_branch
          %1594 = sbr.rel (%p1592) target = $region88
        $region87: #{tpu_custom_call.1} parent=47 // pred_region
          %1596 = dma.done [#allocation5], 256
        $region88: #{tpu_custom_call.1} parent=47 // pred_fallthru
          _
      $region48: #{tpu_custom_call.1} parent=5 // pred_fallthru
        _
      %p1597 = scmp.le.s32.totalorder 2, %s16
      // Predicated region
      $region89: #{tpu_custom_call.1} parent=5 // pred_check
        %p1598 = pneg %p1597
      $region90: #{tpu_custom_call.1} parent=5 // pred_check_branch
        %1600 = sbr.rel (%p1598) target = $region92
      $region91: #{tpu_custom_call.1} parent=5 // pred_region
        %s1601 = ssub.s32 %s16, 2
      $region92: #{tpu_custom_call.1} parent=5 // pred_fallthru
        _
    $region6: #{tpu_custom_call.1} parent=1 // loop_footer
      %s20 = sadd.s32 1, %s16
    $region7: #{tpu_custom_call.1} parent=1 // loop_footer_branch
      %15 = sbr.rel target = $region3
    $region8: #{tpu_custom_call.1} parent=1 // loop_exit
      _
    %1602 = vsyncpa [#allocation4], 1
    %s1603 = scalar_lea.sflag [#allocation4], 1
    %1604 = vsyncpa %s1603, 1
    %1605 = vsyncpa [#allocation7], 1
    %1606 = vsyncpa [#allocation5], 1
    %s1607 = scalar_lea.sflag [#allocation5], 1
    %1608 = vsyncpa %s1607, 1

</llo_original>
